<compile_context>
chip_gen: v7x
topology: tpu7x:2x2x1
jax: 0.10.0
libtpu: 0.0.40
codegen_flags: <defaults>
</compile_context>

<pallas_src>
import functools

import jax
import jax.numpy as jnp
from jax.experimental import pallas as pl
from jax.experimental.pallas import tpu as pltpu


def _round_up(x, m):
    return (x + m - 1) // m * m


def _num_batch_tiles():
    """Grid over the batch: 1 tile on single-TC chips (v5e/v6e), 2 on v7x."""
    try:
        kind = jax.devices()[0].device_kind.lower()
    except Exception:
        return 1
    return 2 if "v7" in kind else 1


def _make_mlp_kernel(num_layers, row_chunk=256):
    """Fused MLP kernel.  refs = (w0, b0, w1, b1, ..., o_ref)."""

    def kernel(x_ref, *refs):
        o_ref = refs[-1]
        tm = x_ref.shape[0]
        # Sub-chunk the batch tile (multiples of 8 rows) so MXU work of chunk
        # j overlaps the VPU bias+ReLU epilogue of chunk j-1.
        for c in range(0, tm, row_chunk):
            rows = min(row_chunk, tm - c)
            h = x_ref[c:c + rows, :]
            for l in range(num_layers):
                w_ref = refs[2 * l]
                b_ref = refs[2 * l + 1]
                # TODO(synk): cast h / w operands to bf16 on v6e/v7x once
                # layer widths grow enough to be MXU-bound.
                h = jnp.dot(h, w_ref[...], preferred_element_type=jnp.float32)
                h = jnp.maximum(h + b_ref[...], 0.0)   # bias + ReLU in f32
            o_ref[c:c + rows, :] = h.astype(o_ref.dtype)

    return kernel


def prepare_params(params):
    """One-time prep (call once, outside the per-step path).

    Pads only the *hidden* feature dims up to 128 lanes (lane-dense
    intermediate matmuls); the input K and final output N keep their logical
    sizes so the per-call wrapper never pads activations or slices results.
    Zero padding is exact: padded weight rows/cols and bias lanes are 0, so
    padded activation lanes stay 0 through matmul + bias + ReLU.
    """
    n = len(params)
    dims = [params[0][0].shape[0]] + [w.shape[1] for (w, _) in params]
    pdims = list(dims)
    for i in range(1, n):                       # pad hidden boundaries only
        pdims[i] = _round_up(dims[i], 128)

    padded = []
    for l, (w, b) in enumerate(params):
        kin, kout = w.shape
        w_p = jnp.zeros((pdims[l], pdims[l + 1]), w.dtype).at[:kin, :kout].set(w)
        b_p = jnp.zeros((1, pdims[l + 1]), b.dtype).at[0, :kout].set(b)
        padded += [w_p, b_p]
    return tuple(padded)


@functools.partial(jax.jit, static_argnames=("num_tiles",))
def neural_network_forward(x, padded_wb, *, num_tiles=1):
    """Fused forward pass of the MLP: (Linear -> ReLU) for every layer.

    x: (M, K) f32 (logical, unpadded).  padded_wb: output of prepare_params.
    One pallas_call for the entire network.
    """
    M, K = x.shape
    n_layers = len(padded_wb) // 2
    out_dim = padded_wb[2 * (n_layers - 1)].shape[1]   # logical output width

    tm = _round_up(-(-M // num_tiles), 8)
    M_pad = tm * num_tiles
    if M_pad != M:
        # Rare batch-row-only padding (no feature-dim padding).  Padded rows
        # compute relu(bias)-derived garbage but are independent of real rows
        # and sliced off below.
        x = jnp.zeros((M_pad, K), x.dtype).at[:M, :].set(x)

    # x / out tiled over the batch; weights & biases are full-array blocks
    # with constant index_maps (stay VMEM-resident across the grid).
    in_specs = [pl.BlockSpec((tm, K), lambda i: (i, 0))]
    for l in range(n_layers):
        # TODO(synk): pipeline_mode=pl.Buffered(1) on these constant blocks to
        # drop the redundant second buffer if layer widths ever grow.
        in_specs.append(pl.BlockSpec(padded_wb[2 * l].shape, lambda i: (0, 0)))
        in_specs.append(pl.BlockSpec(padded_wb[2 * l + 1].shape, lambda i: (0, 0)))
    out_spec = pl.BlockSpec((tm, out_dim), lambda i: (i, 0))

    out = pl.pallas_call(
        _make_mlp_kernel(n_layers),
        out_shape=jax.ShapeDtypeStruct((M_pad, out_dim), x.dtype),
        grid_spec=pltpu.PrefetchScalarGridSpec(
            num_scalar_prefetch=0,
            grid=(num_tiles,),
            in_specs=in_specs,
            out_specs=out_spec,
        ),
        compiler_params=pltpu.CompilerParams(
            dimension_semantics=("parallel",),   # one tile per TensorCore on v7x
        ),
    )(x, *padded_wb)

    return out if M_pad == M else out[:M]


def init_mlp_params(key, layers):
    """Deterministic init matching nn.Linear shapes.

    Weights stored as (in_size, out_size) = PyTorch weight.T ;
    values ~ U(-1/sqrt(in), 1/sqrt(in)) like torch's default init.
    """
    params = []
    for in_size, out_size in zip(layers, layers[1:]):
        key, kw, kb = jax.random.split(key, 3)
        bound = 1.0 / jnp.sqrt(jnp.float32(in_size))
        w = jax.random.uniform(
            kw, (in_size, out_size), jnp.float32, minval=-bound, maxval=bound
        )
        b = jax.random.uniform(
            kb, (out_size,), jnp.float32, minval=-bound, maxval=bound
        )
        params.append((w, b))
    return params


def _reference_forward(x, params):
    for w, b in params:
        x = jnp.maximum(x @ w + b, 0.0)
    return x


if __name__ == "__main__":
    key = jax.random.PRNGKey(0)
    k_params, k_x = jax.random.split(key)

    layers = [16, 32, 64, 8]      # layer sizes, as in NeuralNetwork(layers)
    batch = 512

    params = init_mlp_params(k_params, layers)
    padded_wb = prepare_params(params)            # one-time padding, off hot path
    x = jax.random.normal(k_x, (batch, layers[0]), jnp.float32)

    out = neural_network_forward(x, padded_wb, num_tiles=_num_batch_tiles())
    out = jax.block_until_ready(out)

    # sanity check against a pure-JAX reference
    ref = _reference_forward(x, params)
    assert out.shape == (batch, layers[-1])
    assert jnp.allclose(out, ref, atol=1e-4, rtol=1e-4)

    print("KERNEL_OK")
</pallas_src>

<mosaic_0001>
module attributes {stable_mosaic.version = 11 : i64} {
  func.func @kernel(%arg0: i32, %arg1: memref<512x16xf32, #tpu.memory_space<vmem>>, %arg2: memref<16x128xf32, #tpu.memory_space<vmem>>, %arg3: memref<1x128xf32, #tpu.memory_space<vmem>>, %arg4: memref<128x128xf32, #tpu.memory_space<vmem>>, %arg5: memref<1x128xf32, #tpu.memory_space<vmem>>, %arg6: memref<128x8xf32, #tpu.memory_space<vmem>>, %arg7: memref<1x8xf32, #tpu.memory_space<vmem>>, %arg8: memref<512x8xf32, #tpu.memory_space<vmem>>) attributes {dimension_semantics = [#tpu.dimension_semantics<parallel>], iteration_bounds = array<i64: 1>, scalar_prefetch = 0 : i64, scratch_operands = 0 : i64, tpu.core_type = #tpu.core_type<tc>, window_params = [{transform_indices = @transform_0, window_bounds = array<i64: 512, 16>}, {pipeline_mode = #tpu.pipeline_mode<synchronous>, transform_indices = @transform_1, window_bounds = array<i64: 16, 128>}, {pipeline_mode = #tpu.pipeline_mode<synchronous>, transform_indices = @transform_2, window_bounds = array<i64: 1, 128>}, {pipeline_mode = #tpu.pipeline_mode<synchronous>, transform_indices = @transform_3, window_bounds = array<i64: 128, 128>}, {pipeline_mode = #tpu.pipeline_mode<synchronous>, transform_indices = @transform_4, window_bounds = array<i64: 1, 128>}, {pipeline_mode = #tpu.pipeline_mode<synchronous>, transform_indices = @transform_5, window_bounds = array<i64: 128, 8>}, {pipeline_mode = #tpu.pipeline_mode<synchronous>, transform_indices = @transform_6, window_bounds = array<i64: 1, 8>}, {transform_indices = @transform_7, window_bounds = array<i64: 512, 8>}]} {
    %c0 = arith.constant 0 : index
    %c0_0 = arith.constant 0 : index
    %0 = vector.load %arg1[%c0, %c0_0] : memref<512x16xf32, #tpu.memory_space<vmem>>, vector<256x16xf32>
    %c0_1 = arith.constant 0 : index
    %c0_2 = arith.constant 0 : index
    %1 = vector.load %arg2[%c0_1, %c0_2] : memref<16x128xf32, #tpu.memory_space<vmem>>, vector<16x128xf32>
    %cst = arith.constant dense<0.000000e+00> : vector<256x128xf32>
    %2 = tpu.matmul %0, %1, %cst {dimension_numbers = #tpu.dot_dimension_numbers<[1], [0], [0], [1], [0, 0, 1, 1], [], []>} : vector<256x16xf32>, vector<16x128xf32>, vector<256x128xf32> -> vector<256x128xf32>
    %c0_3 = arith.constant 0 : index
    %c0_4 = arith.constant 0 : index
    %3 = vector.load %arg3[%c0_3, %c0_4] : memref<1x128xf32, #tpu.memory_space<vmem>>, vector<1x128xf32>
    %4 = vector.broadcast %3 : vector<1x128xf32> to vector<256x128xf32>
    %5 = arith.addf %2, %4 : vector<256x128xf32>
    %cst_5 = arith.constant 0.000000e+00 : f32
    %6 = vector.broadcast %cst_5 : f32 to vector<256x128xf32>
    %7 = arith.maximumf %5, %6 : vector<256x128xf32>
    %c0_6 = arith.constant 0 : index
    %c0_7 = arith.constant 0 : index
    %8 = vector.load %arg4[%c0_6, %c0_7] : memref<128x128xf32, #tpu.memory_space<vmem>>, vector<128x128xf32>
    %cst_8 = arith.constant dense<0.000000e+00> : vector<256x128xf32>
    %9 = tpu.matmul %7, %8, %cst_8 {dimension_numbers = #tpu.dot_dimension_numbers<[1], [0], [0], [1], [0, 0, 1, 1], [], []>} : vector<256x128xf32>, vector<128x128xf32>, vector<256x128xf32> -> vector<256x128xf32>
    %c0_9 = arith.constant 0 : index
    %c0_10 = arith.constant 0 : index
    %10 = vector.load %arg5[%c0_9, %c0_10] : memref<1x128xf32, #tpu.memory_space<vmem>>, vector<1x128xf32>
    %11 = vector.broadcast %10 : vector<1x128xf32> to vector<256x128xf32>
    %12 = arith.addf %9, %11 : vector<256x128xf32>
    %cst_11 = arith.constant 0.000000e+00 : f32
    %13 = vector.broadcast %cst_11 : f32 to vector<256x128xf32>
    %14 = arith.maximumf %12, %13 : vector<256x128xf32>
    %c0_12 = arith.constant 0 : index
    %c0_13 = arith.constant 0 : index
    %15 = vector.load %arg6[%c0_12, %c0_13] : memref<128x8xf32, #tpu.memory_space<vmem>>, vector<128x8xf32>
    %cst_14 = arith.constant dense<0.000000e+00> : vector<256x8xf32>
    %16 = tpu.matmul %14, %15, %cst_14 {dimension_numbers = #tpu.dot_dimension_numbers<[1], [0], [0], [1], [0, 0, 1, 1], [], []>} : vector<256x128xf32>, vector<128x8xf32>, vector<256x8xf32> -> vector<256x8xf32>
    %c0_15 = arith.constant 0 : index
    %c0_16 = arith.constant 0 : index
    %17 = vector.load %arg7[%c0_15, %c0_16] : memref<1x8xf32, #tpu.memory_space<vmem>>, vector<1x8xf32>
    %18 = vector.broadcast %17 : vector<1x8xf32> to vector<256x8xf32>
    %19 = arith.addf %16, %18 : vector<256x8xf32>
    %cst_17 = arith.constant 0.000000e+00 : f32
    %20 = vector.broadcast %cst_17 : f32 to vector<256x8xf32>
    %21 = arith.maximumf %19, %20 : vector<256x8xf32>
    %c0_18 = arith.constant 0 : index
    %c0_19 = arith.constant 0 : index
    %22 = vector.load %arg8[%c0_18, %c0_19] : memref<512x8xf32, #tpu.memory_space<vmem>>, vector<256x8xf32>
    tpu.vector_store %arg8[%c0_18, %c0_19], %21 {strides = array<i32>} : memref<512x8xf32, #tpu.memory_space<vmem>>, vector<256x8xf32>,
    %c256 = arith.constant 256 : index
    %c0_20 = arith.constant 0 : index
    %23 = vector.load %arg1[%c256, %c0_20] : memref<512x16xf32, #tpu.memory_space<vmem>>, vector<256x16xf32>
    %c0_21 = arith.constant 0 : index
    %c0_22 = arith.constant 0 : index
    %24 = vector.load %arg2[%c0_21, %c0_22] : memref<16x128xf32, #tpu.memory_space<vmem>>, vector<16x128xf32>
    %cst_23 = arith.constant dense<0.000000e+00> : vector<256x128xf32>
    %25 = tpu.matmul %23, %24, %cst_23 {dimension_numbers = #tpu.dot_dimension_numbers<[1], [0], [0], [1], [0, 0, 1, 1], [], []>} : vector<256x16xf32>, vector<16x128xf32>, vector<256x128xf32> -> vector<256x128xf32>
    %c0_24 = arith.constant 0 : index
    %c0_25 = arith.constant 0 : index
    %26 = vector.load %arg3[%c0_24, %c0_25] : memref<1x128xf32, #tpu.memory_space<vmem>>, vector<1x128xf32>
    %27 = vector.broadcast %26 : vector<1x128xf32> to vector<256x128xf32>
    %28 = arith.addf %25, %27 : vector<256x128xf32>
    %cst_26 = arith.constant 0.000000e+00 : f32
    %29 = vector.broadcast %cst_26 : f32 to vector<256x128xf32>
    %30 = arith.maximumf %28, %29 : vector<256x128xf32>
    %c0_27 = arith.constant 0 : index
    %c0_28 = arith.constant 0 : index
    %31 = vector.load %arg4[%c0_27, %c0_28] : memref<128x128xf32, #tpu.memory_space<vmem>>, vector<128x128xf32>
    %cst_29 = arith.constant dense<0.000000e+00> : vector<256x128xf32>
    %32 = tpu.matmul %30, %31, %cst_29 {dimension_numbers = #tpu.dot_dimension_numbers<[1], [0], [0], [1], [0, 0, 1, 1], [], []>} : vector<256x128xf32>, vector<128x128xf32>, vector<256x128xf32> -> vector<256x128xf32>
    %c0_30 = arith.constant 0 : index
    %c0_31 = arith.constant 0 : index
    %33 = vector.load %arg5[%c0_30, %c0_31] : memref<1x128xf32, #tpu.memory_space<vmem>>, vector<1x128xf32>
    %34 = vector.broadcast %33 : vector<1x128xf32> to vector<256x128xf32>
    %35 = arith.addf %32, %34 : vector<256x128xf32>
    %cst_32 = arith.constant 0.000000e+00 : f32
    %36 = vector.broadcast %cst_32 : f32 to vector<256x128xf32>
    %37 = arith.maximumf %35, %36 : vector<256x128xf32>
    %c0_33 = arith.constant 0 : index
    %c0_34 = arith.constant 0 : index
    %38 = vector.load %arg6[%c0_33, %c0_34] : memref<128x8xf32, #tpu.memory_space<vmem>>, vector<128x8xf32>
    %cst_35 = arith.constant dense<0.000000e+00> : vector<256x8xf32>
    %39 = tpu.matmul %37, %38, %cst_35 {dimension_numbers = #tpu.dot_dimension_numbers<[1], [0], [0], [1], [0, 0, 1, 1], [], []>} : vector<256x128xf32>, vector<128x8xf32>, vector<256x8xf32> -> vector<256x8xf32>
    %c0_36 = arith.constant 0 : index
    %c0_37 = arith.constant 0 : index
    %40 = vector.load %arg7[%c0_36, %c0_37] : memref<1x8xf32, #tpu.memory_space<vmem>>, vector<1x8xf32>
    %41 = vector.broadcast %40 : vector<1x8xf32> to vector<256x8xf32>
    %42 = arith.addf %39, %41 : vector<256x8xf32>
    %cst_38 = arith.constant 0.000000e+00 : f32
    %43 = vector.broadcast %cst_38 : f32 to vector<256x8xf32>
    %44 = arith.maximumf %42, %43 : vector<256x8xf32>
    %c256_39 = arith.constant 256 : index
    %c0_40 = arith.constant 0 : index
    %45 = vector.load %arg8[%c256_39, %c0_40] : memref<512x8xf32, #tpu.memory_space<vmem>>, vector<256x8xf32>
    tpu.vector_store %arg8[%c256_39, %c0_40], %44 {strides = array<i32>} : memref<512x8xf32, #tpu.memory_space<vmem>>, vector<256x8xf32>,
    return
  }
  func.func @transform_0(%arg0: i32) -> (i32, i32) {
    %c0_i32 = arith.constant 0 : i32
    %c0_i32_0 = arith.constant 0 : i32
    return %arg0, %c0_i32 : i32, i32
  }
  func.func @transform_1(%arg0: i32) -> (i32, i32) {
    %c0_i32 = arith.constant 0 : i32
    %c0_i32_0 = arith.constant 0 : i32
    %c0_i32_1 = arith.constant 0 : i32
    return %c0_i32, %c0_i32_0 : i32, i32
  }
  func.func @transform_2(%arg0: i32) -> (i32, i32) {
    %c0_i32 = arith.constant 0 : i32
    %c0_i32_0 = arith.constant 0 : i32
    %c0_i32_1 = arith.constant 0 : i32
    return %c0_i32, %c0_i32_0 : i32, i32
  }
  func.func @transform_3(%arg0: i32) -> (i32, i32) {
    %c0_i32 = arith.constant 0 : i32
    %c0_i32_0 = arith.constant 0 : i32
    %c0_i32_1 = arith.constant 0 : i32
    return %c0_i32, %c0_i32_0 : i32, i32
  }
  func.func @transform_4(%arg0: i32) -> (i32, i32) {
    %c0_i32 = arith.constant 0 : i32
    %c0_i32_0 = arith.constant 0 : i32
    %c0_i32_1 = arith.constant 0 : i32
    return %c0_i32, %c0_i32_0 : i32, i32
  }
  func.func @transform_5(%arg0: i32) -> (i32, i32) {
    %c0_i32 = arith.constant 0 : i32
    %c0_i32_0 = arith.constant 0 : i32
    %c0_i32_1 = arith.constant 0 : i32
    return %c0_i32, %c0_i32_0 : i32, i32
  }
  func.func @transform_6(%arg0: i32) -> (i32, i32) {
    %c0_i32 = arith.constant 0 : i32
    %c0_i32_0 = arith.constant 0 : i32
    %c0_i32_1 = arith.constant 0 : i32
    return %c0_i32, %c0_i32_0 : i32, i32
  }
  func.func @transform_7(%arg0: i32) -> (i32, i32) {
    %c0_i32 = arith.constant 0 : i32
    %c0_i32_0 = arith.constant 0 : i32
    return %arg0, %c0_i32 : i32, i32
  }
}

</mosaic_0001>

<llo_original>
// kernel: neural_network_forward.1
$region0: #{neural_network_forward.1}
  #allocation0 [shape = 'u32[]', space=smem, size = 0x4, offset = 0x4, fixed_abs, tag = 'smem constant byte address 0x4 - core index']
  #allocation1 [shape = 'u32[144,128]{1,0:T(1,128)}', space=vmem, size = 0x12000, scoped, tag = 'internal scratch']
  %s0 = inlined_call_operand.vmem [shape: f32[512,16], index: 0, kind: input, shape index: {}]
  %s1 = inlined_call_operand.vmem [shape: f32[16,128], index: 1, kind: input, shape index: {}]
  %s2 = inlined_call_operand.vmem [shape: f32[1,128], index: 2, kind: input, shape index: {}]
  %s3 = inlined_call_operand.vmem [shape: f32[128,128], index: 3, kind: input, shape index: {}]
  %s4 = inlined_call_operand.vmem [shape: f32[1,128], index: 4, kind: input, shape index: {}]
  %s5 = inlined_call_operand.vmem [shape: f32[128,8], index: 5, kind: input, shape index: {}]
  %s6 = inlined_call_operand.vmem [shape: f32[1,8], index: 6, kind: input, shape index: {}]
  %s7 = inlined_call_operand.vmem [shape: f32[512,8], index: 7, kind: output, shape index: {}]
  %s8 = sld [smem:[#allocation0]]
  $region38: #{neural_network_forward.1} parent=0
    _
  %s10 = ssub.s32 1, %s8
  %s11 = scalar_select 0, %s10, %s8
  // Predicated region
  $region2: #{neural_network_forward.1} parent=0 // pred_check
    _
  $region3: #{neural_network_forward.1} parent=0 // pred_check_branch
    %13 = sbr.rel (0) target = $region5
  $region4: #{neural_network_forward.1} parent=0 // pred_region
    _
  $region5: #{neural_network_forward.1} parent=0 // pred_fallthru
    _
  // Predicated region
  $region6: #{neural_network_forward.1} parent=0 // pred_check
    _
  $region7: #{neural_network_forward.1} parent=0 // pred_check_branch
    %15 = sbr.rel (0) target = $region9
  $region8: #{neural_network_forward.1} parent=0 // pred_region
    _
  $region9: #{neural_network_forward.1} parent=0 // pred_fallthru
    _
  // Predicated region
  $region10: #{neural_network_forward.1} parent=0 // pred_check
    _
  $region11: #{neural_network_forward.1} parent=0 // pred_check_branch
    %17 = sbr.rel (0) target = $region13
  $region12: #{neural_network_forward.1} parent=0 // pred_region
    _
  $region13: #{neural_network_forward.1} parent=0 // pred_fallthru
    _
  // Predicated region
  $region14: #{neural_network_forward.1} parent=0 // pred_check
    _
  $region15: #{neural_network_forward.1} parent=0 // pred_check_branch
    %19 = sbr.rel (0) target = $region17
  $region16: #{neural_network_forward.1} parent=0 // pred_region
    _
  $region17: #{neural_network_forward.1} parent=0 // pred_fallthru
    _
  // Predicated region
  $region18: #{neural_network_forward.1} parent=0 // pred_check
    _
  $region19: #{neural_network_forward.1} parent=0 // pred_check_branch
    %21 = sbr.rel (0) target = $region21
  $region20: #{neural_network_forward.1} parent=0 // pred_region
    _
  $region21: #{neural_network_forward.1} parent=0 // pred_fallthru
    _
  // Predicated region
  $region22: #{neural_network_forward.1} parent=0 // pred_check
    _
  $region23: #{neural_network_forward.1} parent=0 // pred_check_branch
    %23 = sbr.rel (0) target = $region25
  $region24: #{neural_network_forward.1} parent=0 // pred_region
    _
  $region25: #{neural_network_forward.1} parent=0 // pred_fallthru
    _
  // Predicated region
  $region26: #{neural_network_forward.1} parent=0 // pred_check
    _
  $region27: #{neural_network_forward.1} parent=0 // pred_check_branch
    %25 = sbr.rel (0) target = $region29
  $region28: #{neural_network_forward.1} parent=0 // pred_region
    _
  $region29: #{neural_network_forward.1} parent=0 // pred_fallthru
    _
  %v26 = vld [vmem:[%s0] sm:$0xff]
  %v27 = vld [vmem:[%s0 + $0x8] sm:$0xff]
  %v28 = vld [vmem:[%s0 + $0x10] sm:$0xff]
  %v29 = vld [vmem:[%s0 + $0x18] sm:$0xff]
  %v30 = vld [vmem:[%s0 + $0x20] sm:$0xff]
  %v31 = vld [vmem:[%s0 + $0x28] sm:$0xff]
  %v32 = vld [vmem:[%s0 + $0x30] sm:$0xff]
  %v33 = vld [vmem:[%s0 + $0x38] sm:$0xff]
  %v34 = vld [vmem:[%s0 + $0x40] sm:$0xff]
  %v35 = vld [vmem:[%s0 + $0x48] sm:$0xff]
  %v36 = vld [vmem:[%s0 + $0x50] sm:$0xff]
  %v37 = vld [vmem:[%s0 + $0x58] sm:$0xff]
  %v38 = vld [vmem:[%s0 + $0x60] sm:$0xff]
  %v39 = vld [vmem:[%s0 + $0x68] sm:$0xff]
  %v40 = vld [vmem:[%s0 + $0x70] sm:$0xff]
  %v41 = vld [vmem:[%s0 + $0x78] sm:$0xff]
  %v42 = vld [vmem:[%s0 + $0x80] sm:$0xff]
  %v43 = vld [vmem:[%s0 + $0x88] sm:$0xff]
  %v44 = vld [vmem:[%s0 + $0x90] sm:$0xff]
  %v45 = vld [vmem:[%s0 + $0x98] sm:$0xff]
  %v46 = vld [vmem:[%s0 + $0xa0] sm:$0xff]
  %v47 = vld [vmem:[%s0 + $0xa8] sm:$0xff]
  %v48 = vld [vmem:[%s0 + $0xb0] sm:$0xff]
  %v49 = vld [vmem:[%s0 + $0xb8] sm:$0xff]
  %v50 = vld [vmem:[%s0 + $0xc0] sm:$0xff]
  %v51 = vld [vmem:[%s0 + $0xc8] sm:$0xff]
  %v52 = vld [vmem:[%s0 + $0xd0] sm:$0xff]
  %v53 = vld [vmem:[%s0 + $0xd8] sm:$0xff]
  %v54 = vld [vmem:[%s0 + $0xe0] sm:$0xff]
  %v55 = vld [vmem:[%s0 + $0xe8] sm:$0xff]
  %v56 = vld [vmem:[%s0 + $0xf0] sm:$0xff]
  %v57 = vld [vmem:[%s0 + $0xf8] sm:$0xff]
  %v58 = vld [vmem:[%s1] sm:$0xff]
  %v59 = vld [vmem:[%s1 + $0x8] sm:$0xff]
  %v60 = vld [vmem:[%s2] sm:$0x1]
  %v62 = vlaneseq
  %v63 = vshrl.u32 %v62, 7
  %v64 = vsub.s32 0, %v63
  %v65 = vrot.slane %v60, %v64
  %vm67 = vcmask 130048
  %v69 = vsel %vm67, %v26, 0
  %v72 = vsel %vm67, %v27, 0
  %v75 = vsel %vm67, %v28, 0
  %v78 = vsel %vm67, %v29, 0
  %v81 = vsel %vm67, %v30, 0
  %v84 = vsel %vm67, %v31, 0
  %v87 = vsel %vm67, %v32, 0
  %v90 = vsel %vm67, %v33, 0
  %v93 = vsel %vm67, %v34, 0
  %v96 = vsel %vm67, %v35, 0
  %v99 = vsel %vm67, %v36, 0
  %v102 = vsel %vm67, %v37, 0
  %v105 = vsel %vm67, %v38, 0
  %v108 = vsel %vm67, %v39, 0
  %v111 = vsel %vm67, %v40, 0
  %v114 = vsel %vm67, %v41, 0
  %v117 = vsel %vm67, %v42, 0
  %v120 = vsel %vm67, %v43, 0
  %v123 = vsel %vm67, %v44, 0
  %v126 = vsel %vm67, %v45, 0
  %v129 = vsel %vm67, %v46, 0
  %v132 = vsel %vm67, %v47, 0
  %v135 = vsel %vm67, %v48, 0
  %v138 = vsel %vm67, %v49, 0
  %v141 = vsel %vm67, %v50, 0
  %v144 = vsel %vm67, %v51, 0
  %v147 = vsel %vm67, %v52, 0
  %v150 = vsel %vm67, %v53, 0
  %v153 = vsel %vm67, %v54, 0
  %v156 = vsel %vm67, %v55, 0
  %v159 = vsel %vm67, %v56, 0
  %v162 = vsel %vm67, %v57, 0
  %164 = vmatprep.subr.mxu0 0.0
  %165 = vmatpush1.msra.mxu0 %v58
  %166 = vmatprep.subr.mxu0 0.0
  %167 = vmatpush1.msra.mxu0 %v59
  %168 = vmatprep.subr.mxu0 0.0
  %169 = vmatpush1.msra.mxu0 0.0
  %170 = vmatprep.subr.mxu0 0.0
  %171 = vmatpush1.msra.mxu0 0.0
  %172 = vmatprep.subr.mxu0 0.0
  %173 = vmatpush1.msra.mxu0 0.0
  %174 = vmatprep.subr.mxu0 0.0
  %175 = vmatpush1.msra.mxu0 0.0
  %176 = vmatprep.subr.mxu0 0.0
  %177 = vmatpush1.msra.mxu0 0.0
  %178 = vmatprep.subr.mxu0 0.0
  %179 = vmatpush1.msra.mxu0 0.0
  %180 = vmatprep.subr.mxu0 0.0
  %181 = vmatpush1.msra.mxu0 0.0
  %182 = vmatprep.subr.mxu0 0.0
  %183 = vmatpush1.msra.mxu0 0.0
  %184 = vmatprep.subr.mxu0 0.0
  %185 = vmatpush1.msra.mxu0 0.0
  %186 = vmatprep.subr.mxu0 0.0
  %187 = vmatpush1.msra.mxu0 0.0
  %188 = vmatprep.subr.mxu0 0.0
  %189 = vmatpush1.msra.mxu0 0.0
  %190 = vmatprep.subr.mxu0 0.0
  %191 = vmatpush1.msra.mxu0 0.0
  %192 = vmatprep.subr.mxu0 0.0
  %193 = vmatpush1.msra.mxu0 0.0
  %194 = vmatprep.subr.mxu0 0.0
  %195 = vmatpush1.msra.mxu0 0.0
  %196 = vmatprep.subr.mxu0 0.0
  %197 = vmatpush1.msra.mxu0 0.0
  %198 = vmatprep.subr.mxu0 0.0
  %199 = vmatpush1.msra.mxu0 0.0
  %200 = vmatprep.subr.mxu0 0.0
  %201 = vmatpush1.msra.mxu0 0.0
  %202 = vmatprep.subr.mxu0 0.0
  %203 = vmatpush1.msra.mxu0 0.0
  %204 = vmatprep.subr.mxu0 0.0
  %205 = vmatpush1.msra.mxu0 0.0
  %206 = vmatprep.subr.mxu0 0.0
  %207 = vmatpush1.msra.mxu0 0.0
  %208 = vmatprep.subr.mxu0 0.0
  %209 = vmatpush1.msra.mxu0 0.0
  %210 = vmatprep.subr.mxu0 0.0
  %211 = vmatpush1.msra.mxu0 0.0
  %212 = vmatprep.subr.mxu0 0.0
  %213 = vmatpush1.msra.mxu0 0.0
  %214 = vmatprep.subr.mxu0 0.0
  %215 = vmatpush1.msra.mxu0 0.0
  %216 = vmatprep.subr.mxu0 0.0
  %217 = vmatpush1.msra.mxu0 0.0
  %218 = vmatprep.subr.mxu0 0.0
  %219 = vmatpush1.msra.mxu0 0.0
  %220 = vmatprep.subr.mxu0 0.0
  %221 = vmatpush1.msra.mxu0 0.0
  %222 = vmatprep.subr.mxu0 0.0
  %223 = vmatpush1.msra.mxu0 0.0
  %224 = vmatprep.subr.mxu0 0.0
  %225 = vmatpush1.msra.mxu0 0.0
  %226 = vmatprep.subr.mxu0 0.0
  %227 = vmatpush1.msra.mxu0 0.0
  %228 = vmatprep.mubr.f32.mxu0 0.0
  %229 = vmatmul.mubr.f32.gmra.mrb[0].mxu0 %v69
  %v230 = vpop.f32.mrb[0].mxu0
  %v231 = vadd.f32 %v65, %v230
  %v232 = vpop.f32.mrb[0].mxu0
  %233 = vmatprep.mubr.f32.mxu0 0.0
  %234 = vmatmul.mubr.f32.gmra.mrb[0].mxu0 %v72
  %v235 = vpop.f32.mrb[0].mxu0
  %v236 = vadd.f32 %v65, %v235
  %v237 = vpop.f32.mrb[0].mxu0
  %238 = vmatprep.mubr.f32.mxu0 0.0
  %239 = vmatmul.mubr.f32.gmra.mrb[0].mxu0 %v75
  %v240 = vpop.f32.mrb[0].mxu0
  %v241 = vadd.f32 %v65, %v240
  %v242 = vpop.f32.mrb[0].mxu0
  %243 = vmatprep.mubr.f32.mxu0 0.0
  %244 = vmatmul.mubr.f32.gmra.mrb[0].mxu0 %v78
  %v245 = vpop.f32.mrb[0].mxu0
  %v246 = vadd.f32 %v65, %v245
  %v247 = vpop.f32.mrb[0].mxu0
  %248 = vmatprep.mubr.f32.mxu0 0.0
  %249 = vmatmul.mubr.f32.gmra.mrb[0].mxu0 %v81
  %v250 = vpop.f32.mrb[0].mxu0
  %v251 = vadd.f32 %v65, %v250
  %v252 = vpop.f32.mrb[0].mxu0
  %253 = vmatprep.mubr.f32.mxu0 0.0
  %254 = vmatmul.mubr.f32.gmra.mrb[0].mxu0 %v84
  %v255 = vpop.f32.mrb[0].mxu0
  %v256 = vadd.f32 %v65, %v255
  %v257 = vpop.f32.mrb[0].mxu0
  %258 = vmatprep.mubr.f32.mxu0 0.0
  %259 = vmatmul.mubr.f32.gmra.mrb[0].mxu0 %v87
  %v260 = vpop.f32.mrb[0].mxu0
  %v261 = vadd.f32 %v65, %v260
  %v262 = vpop.f32.mrb[0].mxu0
  %263 = vmatprep.mubr.f32.mxu0 0.0
  %264 = vmatmul.mubr.f32.gmra.mrb[0].mxu0 %v90
  %v265 = vpop.f32.mrb[0].mxu0
  %v266 = vadd.f32 %v65, %v265
  %v267 = vpop.f32.mrb[0].mxu0
  %268 = vmatprep.mubr.f32.mxu0 0.0
  %269 = vmatmul.mubr.f32.gmra.mrb[0].mxu0 %v93
  %v270 = vpop.f32.mrb[0].mxu0
  %v271 = vadd.f32 %v65, %v270
  %v272 = vpop.f32.mrb[0].mxu0
  %273 = vmatprep.mubr.f32.mxu0 0.0
  %274 = vmatmul.mubr.f32.gmra.mrb[0].mxu0 %v96
  %v275 = vpop.f32.mrb[0].mxu0
  %v276 = vadd.f32 %v65, %v275
  %v277 = vpop.f32.mrb[0].mxu0
  %278 = vmatprep.mubr.f32.mxu0 0.0
  %279 = vmatmul.mubr.f32.gmra.mrb[0].mxu0 %v99
  %v280 = vpop.f32.mrb[0].mxu0
  %v281 = vadd.f32 %v65, %v280
  %v282 = vpop.f32.mrb[0].mxu0
  %283 = vmatprep.mubr.f32.mxu0 0.0
  %284 = vmatmul.mubr.f32.gmra.mrb[0].mxu0 %v102
  %v285 = vpop.f32.mrb[0].mxu0
  %v286 = vadd.f32 %v65, %v285
  %v287 = vpop.f32.mrb[0].mxu0
  %288 = vmatprep.mubr.f32.mxu0 0.0
  %289 = vmatmul.mubr.f32.gmra.mrb[0].mxu0 %v105
  %v290 = vpop.f32.mrb[0].mxu0
  %v291 = vadd.f32 %v65, %v290
  %v292 = vpop.f32.mrb[0].mxu0
  %293 = vmatprep.mubr.f32.mxu0 0.0
  %294 = vmatmul.mubr.f32.gmra.mrb[0].mxu0 %v108
  %v295 = vpop.f32.mrb[0].mxu0
  %v296 = vadd.f32 %v65, %v295
  %v297 = vpop.f32.mrb[0].mxu0
  %298 = vmatprep.mubr.f32.mxu0 0.0
  %299 = vmatmul.mubr.f32.gmra.mrb[0].mxu0 %v111
  %v300 = vpop.f32.mrb[0].mxu0
  %v301 = vadd.f32 %v65, %v300
  %v302 = vpop.f32.mrb[0].mxu0
  %303 = vmatprep.mubr.f32.mxu0 0.0
  %304 = vmatmul.mubr.f32.gmra.mrb[0].mxu0 %v114
  %v305 = vpop.f32.mrb[0].mxu0
  %v306 = vadd.f32 %v65, %v305
  %v307 = vpop.f32.mrb[0].mxu0
  %308 = vmatprep.mubr.f32.mxu0 0.0
  %309 = vmatmul.mubr.f32.gmra.mrb[0].mxu0 %v117
  %v310 = vpop.f32.mrb[0].mxu0
  %v311 = vadd.f32 %v65, %v310
  %v312 = vpop.f32.mrb[0].mxu0
  %313 = vmatprep.mubr.f32.mxu0 0.0
  %314 = vmatmul.mubr.f32.gmra.mrb[0].mxu0 %v120
  %v315 = vpop.f32.mrb[0].mxu0
  %v316 = vadd.f32 %v65, %v315
  %v317 = vpop.f32.mrb[0].mxu0
  %318 = vmatprep.mubr.f32.mxu0 0.0
  %319 = vmatmul.mubr.f32.gmra.mrb[0].mxu0 %v123
  %v320 = vpop.f32.mrb[0].mxu0
  %v321 = vadd.f32 %v65, %v320
  %v322 = vpop.f32.mrb[0].mxu0
  %323 = vmatprep.mubr.f32.mxu0 0.0
  %324 = vmatmul.mubr.f32.gmra.mrb[0].mxu0 %v126
  %v325 = vpop.f32.mrb[0].mxu0
  %v326 = vadd.f32 %v65, %v325
  %v327 = vpop.f32.mrb[0].mxu0
  %328 = vmatprep.mubr.f32.mxu0 0.0
  %329 = vmatmul.mubr.f32.gmra.mrb[0].mxu0 %v129
  %v330 = vpop.f32.mrb[0].mxu0
  %v331 = vadd.f32 %v65, %v330
  %v332 = vpop.f32.mrb[0].mxu0
  %333 = vmatprep.mubr.f32.mxu0 0.0
  %334 = vmatmul.mubr.f32.gmra.mrb[0].mxu0 %v132
  %v335 = vpop.f32.mrb[0].mxu0
  %v336 = vadd.f32 %v65, %v335
  %v337 = vpop.f32.mrb[0].mxu0
  %338 = vmatprep.mubr.f32.mxu0 0.0
  %339 = vmatmul.mubr.f32.gmra.mrb[0].mxu0 %v135
  %v340 = vpop.f32.mrb[0].mxu0
  %v341 = vadd.f32 %v65, %v340
  %v342 = vpop.f32.mrb[0].mxu0
  %343 = vmatprep.mubr.f32.mxu0 0.0
  %344 = vmatmul.mubr.f32.gmra.mrb[0].mxu0 %v138
  %v345 = vpop.f32.mrb[0].mxu0
  %v346 = vadd.f32 %v65, %v345
  %v347 = vpop.f32.mrb[0].mxu0
  %348 = vmatprep.mubr.f32.mxu0 0.0
  %349 = vmatmul.mubr.f32.gmra.mrb[0].mxu0 %v141
  %v350 = vpop.f32.mrb[0].mxu0
  %v351 = vadd.f32 %v65, %v350
  %v352 = vpop.f32.mrb[0].mxu0
  %353 = vmatprep.mubr.f32.mxu0 0.0
  %354 = vmatmul.mubr.f32.gmra.mrb[0].mxu0 %v144
  %v355 = vpop.f32.mrb[0].mxu0
  %v356 = vadd.f32 %v65, %v355
  %v357 = vpop.f32.mrb[0].mxu0
  %358 = vmatprep.mubr.f32.mxu0 0.0
  %359 = vmatmul.mubr.f32.gmra.mrb[0].mxu0 %v147
  %v360 = vpop.f32.mrb[0].mxu0
  %v361 = vadd.f32 %v65, %v360
  %v362 = vpop.f32.mrb[0].mxu0
  %363 = vmatprep.mubr.f32.mxu0 0.0
  %364 = vmatmul.mubr.f32.gmra.mrb[0].mxu0 %v150
  %v365 = vpop.f32.mrb[0].mxu0
  %v366 = vadd.f32 %v65, %v365
  %v367 = vpop.f32.mrb[0].mxu0
  %368 = vmatprep.mubr.f32.mxu0 0.0
  %369 = vmatmul.mubr.f32.gmra.mrb[0].mxu0 %v153
  %v370 = vpop.f32.mrb[0].mxu0
  %v371 = vadd.f32 %v65, %v370
  %v372 = vpop.f32.mrb[0].mxu0
  %373 = vmatprep.mubr.f32.mxu0 0.0
  %374 = vmatmul.mubr.f32.gmra.mrb[0].mxu0 %v156
  %v375 = vpop.f32.mrb[0].mxu0
  %v376 = vadd.f32 %v65, %v375
  %v377 = vpop.f32.mrb[0].mxu0
  %378 = vmatprep.mubr.f32.mxu0 0.0
  %379 = vmatmul.mubr.f32.gmra.mrb[0].mxu0 %v159
  %v380 = vpop.f32.mrb[0].mxu0
  %v381 = vadd.f32 %v65, %v380
  %v382 = vpop.f32.mrb[0].mxu0
  %383 = vmatprep.mubr.f32.mxu0 0.0
  %384 = vmatmul.mubr.f32.gmra.mrb[0].mxu0 %v162
  %v385 = vpop.f32.mrb[0].mxu0
  %v386 = vadd.f32 %v65, %v385
  %v387 = vpop.f32.mrb[0].mxu0
  %388 = vdwg.mxu0
  %v389 = vmax.f32 %v231, 0.0
  %v390 = vmax.f32 %v236, 0.0
  %v391 = vmax.f32 %v241, 0.0
  %v392 = vmax.f32 %v246, 0.0
  %v393 = vmax.f32 %v251, 0.0
  %v394 = vmax.f32 %v256, 0.0
  %v395 = vmax.f32 %v261, 0.0
  %v396 = vmax.f32 %v266, 0.0
  %v397 = vmax.f32 %v271, 0.0
  %v398 = vmax.f32 %v276, 0.0
  %v399 = vmax.f32 %v281, 0.0
  %v400 = vmax.f32 %v286, 0.0
  %v401 = vmax.f32 %v291, 0.0
  %v402 = vmax.f32 %v296, 0.0
  %v403 = vmax.f32 %v301, 0.0
  %v404 = vmax.f32 %v306, 0.0
  %v405 = vmax.f32 %v311, 0.0
  %v406 = vmax.f32 %v316, 0.0
  %v407 = vmax.f32 %v321, 0.0
  %v408 = vmax.f32 %v326, 0.0
  %v409 = vmax.f32 %v331, 0.0
  %v410 = vmax.f32 %v336, 0.0
  %v411 = vmax.f32 %v341, 0.0
  %v412 = vmax.f32 %v346, 0.0
  %v413 = vmax.f32 %v351, 0.0
  %v414 = vmax.f32 %v356, 0.0
  %v415 = vmax.f32 %v361, 0.0
  %v416 = vmax.f32 %v366, 0.0
  %v417 = vmax.f32 %v371, 0.0
  %v418 = vmax.f32 %v376, 0.0
  %v419 = vmax.f32 %v381, 0.0
  %v420 = vmax.f32 %v386, 0.0
  %v421 = vld [vmem:[%s3] sm:$0xff]
  %v422 = vld [vmem:[%s3 + $0x8] sm:$0xff]
  %v423 = vld [vmem:[%s3 + $0x10] sm:$0xff]
  %v424 = vld [vmem:[%s3 + $0x18] sm:$0xff]
  %v425 = vld [vmem:[%s3 + $0x20] sm:$0xff]
  %v426 = vld [vmem:[%s3 + $0x28] sm:$0xff]
  %v427 = vld [vmem:[%s3 + $0x30] sm:$0xff]
  %v428 = vld [vmem:[%s3 + $0x38] sm:$0xff]
  %v429 = vld [vmem:[%s3 + $0x40] sm:$0xff]
  %v430 = vld [vmem:[%s3 + $0x48] sm:$0xff]
  %v431 = vld [vmem:[%s3 + $0x50] sm:$0xff]
  %v432 = vld [vmem:[%s3 + $0x58] sm:$0xff]
  %v433 = vld [vmem:[%s3 + $0x60] sm:$0xff]
  %v434 = vld [vmem:[%s3 + $0x68] sm:$0xff]
  %v435 = vld [vmem:[%s3 + $0x70] sm:$0xff]
  %v436 = vld [vmem:[%s3 + $0x78] sm:$0xff]
  %v437 = vld [vmem:[%s4] sm:$0x1]
  %v439 = vlaneseq
  %v440 = vshrl.u32 %v439, 7
  %v441 = vsub.s32 0, %v440
  %v442 = vrot.slane %v437, %v441
  %444 = vmatprep.subr.mxu0 0.0
  %445 = vmatpush1.msra.mxu0 %v421
  %446 = vmatprep.subr.mxu0 0.0
  %447 = vmatpush1.msra.mxu0 %v422
  %448 = vmatprep.subr.mxu0 0.0
  %449 = vmatpush1.msra.mxu0 %v423
  %450 = vmatprep.subr.mxu0 0.0
  %451 = vmatpush1.msra.mxu0 %v424
  %452 = vmatprep.subr.mxu0 0.0
  %453 = vmatpush1.msra.mxu0 %v425
  %454 = vmatprep.subr.mxu0 0.0
  %455 = vmatpush1.msra.mxu0 %v426
  %456 = vmatprep.subr.mxu0 0.0
  %457 = vmatpush1.msra.mxu0 %v427
  %458 = vmatprep.subr.mxu0 0.0
  %459 = vmatpush1.msra.mxu0 %v428
  %460 = vmatprep.subr.mxu0 0.0
  %461 = vmatpush1.msra.mxu0 %v429
  %462 = vmatprep.subr.mxu0 0.0
  %463 = vmatpush1.msra.mxu0 %v430
  %464 = vmatprep.subr.mxu0 0.0
  %465 = vmatpush1.msra.mxu0 %v431
  %466 = vmatprep.subr.mxu0 0.0
  %467 = vmatpush1.msra.mxu0 %v432
  %468 = vmatprep.subr.mxu0 0.0
  %469 = vmatpush1.msra.mxu0 %v433
  %470 = vmatprep.subr.mxu0 0.0
  %471 = vmatpush1.msra.mxu0 %v434
  %472 = vmatprep.subr.mxu0 0.0
  %473 = vmatpush1.msra.mxu0 %v435
  %474 = vmatprep.subr.mxu0 0.0
  %475 = vmatpush1.msra.mxu0 %v436
  %476 = vmatprep.subr.mxu0 0.0
  %477 = vmatpush1.msra.mxu0 0.0
  %478 = vmatprep.subr.mxu0 0.0
  %479 = vmatpush1.msra.mxu0 0.0
  %480 = vmatprep.subr.mxu0 0.0
  %481 = vmatpush1.msra.mxu0 0.0
  %482 = vmatprep.subr.mxu0 0.0
  %483 = vmatpush1.msra.mxu0 0.0
  %484 = vmatprep.subr.mxu0 0.0
  %485 = vmatpush1.msra.mxu0 0.0
  %486 = vmatprep.subr.mxu0 0.0
  %487 = vmatpush1.msra.mxu0 0.0
  %488 = vmatprep.subr.mxu0 0.0
  %489 = vmatpush1.msra.mxu0 0.0
  %490 = vmatprep.subr.mxu0 0.0
  %491 = vmatpush1.msra.mxu0 0.0
  %492 = vmatprep.subr.mxu0 0.0
  %493 = vmatpush1.msra.mxu0 0.0
  %494 = vmatprep.subr.mxu0 0.0
  %495 = vmatpush1.msra.mxu0 0.0
  %496 = vmatprep.subr.mxu0 0.0
  %497 = vmatpush1.msra.mxu0 0.0
  %498 = vmatprep.subr.mxu0 0.0
  %499 = vmatpush1.msra.mxu0 0.0
  %500 = vmatprep.subr.mxu0 0.0
  %501 = vmatpush1.msra.mxu0 0.0
  %502 = vmatprep.subr.mxu0 0.0
  %503 = vmatpush1.msra.mxu0 0.0
  %504 = vmatprep.subr.mxu0 0.0
  %505 = vmatpush1.msra.mxu0 0.0
  %506 = vmatprep.subr.mxu0 0.0
  %507 = vmatpush1.msra.mxu0 0.0
  %508 = vmatprep.mubr.f32.mxu0 0.0
  %509 = vmatmul.mubr.f32.gmra.mrb[0].mxu0 %v389
  %v510 = vpop.f32.mrb[0].mxu0
  %v511 = vadd.f32 %v442, %v510
  %v512 = vpop.f32.mrb[0].mxu0
  %513 = vmatprep.mubr.f32.mxu0 0.0
  %514 = vmatmul.mubr.f32.gmra.mrb[0].mxu0 %v390
  %v515 = vpop.f32.mrb[0].mxu0
  %v516 = vadd.f32 %v442, %v515
  %v517 = vpop.f32.mrb[0].mxu0
  %518 = vmatprep.mubr.f32.mxu0 0.0
  %519 = vmatmul.mubr.f32.gmra.mrb[0].mxu0 %v391
  %v520 = vpop.f32.mrb[0].mxu0
  %v521 = vadd.f32 %v442, %v520
  %v522 = vpop.f32.mrb[0].mxu0
  %523 = vmatprep.mubr.f32.mxu0 0.0
  %524 = vmatmul.mubr.f32.gmra.mrb[0].mxu0 %v392
  %v525 = vpop.f32.mrb[0].mxu0
  %v526 = vadd.f32 %v442, %v525
  %v527 = vpop.f32.mrb[0].mxu0
  %528 = vmatprep.mubr.f32.mxu0 0.0
  %529 = vmatmul.mubr.f32.gmra.mrb[0].mxu0 %v393
  %v530 = vpop.f32.mrb[0].mxu0
  %v531 = vadd.f32 %v442, %v530
  %v532 = vpop.f32.mrb[0].mxu0
  %533 = vmatprep.mubr.f32.mxu0 0.0
  %534 = vmatmul.mubr.f32.gmra.mrb[0].mxu0 %v394
  %v535 = vpop.f32.mrb[0].mxu0
  %v536 = vadd.f32 %v442, %v535
  %v537 = vpop.f32.mrb[0].mxu0
  %538 = vmatprep.mubr.f32.mxu0 0.0
  %539 = vmatmul.mubr.f32.gmra.mrb[0].mxu0 %v395
  %v540 = vpop.f32.mrb[0].mxu0
  %v541 = vadd.f32 %v442, %v540
  %v542 = vpop.f32.mrb[0].mxu0
  %543 = vmatprep.mubr.f32.mxu0 0.0
  %544 = vmatmul.mubr.f32.gmra.mrb[0].mxu0 %v396
  %v545 = vpop.f32.mrb[0].mxu0
  %v546 = vadd.f32 %v442, %v545
  %v547 = vpop.f32.mrb[0].mxu0
  %548 = vmatprep.mubr.f32.mxu0 0.0
  %549 = vmatmul.mubr.f32.gmra.mrb[0].mxu0 %v397
  %v550 = vpop.f32.mrb[0].mxu0
  %v551 = vadd.f32 %v442, %v550
  %v552 = vpop.f32.mrb[0].mxu0
  %553 = vmatprep.mubr.f32.mxu0 0.0
  %554 = vmatmul.mubr.f32.gmra.mrb[0].mxu0 %v398
  %v555 = vpop.f32.mrb[0].mxu0
  %v556 = vadd.f32 %v442, %v555
  %v557 = vpop.f32.mrb[0].mxu0
  %558 = vmatprep.mubr.f32.mxu0 0.0
  %559 = vmatmul.mubr.f32.gmra.mrb[0].mxu0 %v399
  %v560 = vpop.f32.mrb[0].mxu0
  %v561 = vadd.f32 %v442, %v560
  %v562 = vpop.f32.mrb[0].mxu0
  %563 = vmatprep.mubr.f32.mxu0 0.0
  %564 = vmatmul.mubr.f32.gmra.mrb[0].mxu0 %v400
  %v565 = vpop.f32.mrb[0].mxu0
  %v566 = vadd.f32 %v442, %v565
  %v567 = vpop.f32.mrb[0].mxu0
  %568 = vmatprep.mubr.f32.mxu0 0.0
  %569 = vmatmul.mubr.f32.gmra.mrb[0].mxu0 %v401
  %v570 = vpop.f32.mrb[0].mxu0
  %v571 = vadd.f32 %v442, %v570
  %v572 = vpop.f32.mrb[0].mxu0
  %573 = vmatprep.mubr.f32.mxu0 0.0
  %574 = vmatmul.mubr.f32.gmra.mrb[0].mxu0 %v402
  %v575 = vpop.f32.mrb[0].mxu0
  %v576 = vadd.f32 %v442, %v575
  %v577 = vpop.f32.mrb[0].mxu0
  %578 = vmatprep.mubr.f32.mxu0 0.0
  %579 = vmatmul.mubr.f32.gmra.mrb[0].mxu0 %v403
  %v580 = vpop.f32.mrb[0].mxu0
  %v581 = vadd.f32 %v442, %v580
  %v582 = vpop.f32.mrb[0].mxu0
  %583 = vmatprep.mubr.f32.mxu0 0.0
  %584 = vmatmul.mubr.f32.gmra.mrb[0].mxu0 %v404
  %v585 = vpop.f32.mrb[0].mxu0
  %v586 = vadd.f32 %v442, %v585
  %v587 = vpop.f32.mrb[0].mxu0
  %588 = vmatprep.mubr.f32.mxu0 0.0
  %589 = vmatmul.mubr.f32.gmra.mrb[0].mxu0 %v405
  %v590 = vpop.f32.mrb[0].mxu0
  %v591 = vadd.f32 %v442, %v590
  %v592 = vpop.f32.mrb[0].mxu0
  %593 = vmatprep.mubr.f32.mxu0 0.0
  %594 = vmatmul.mubr.f32.gmra.mrb[0].mxu0 %v406
  %v595 = vpop.f32.mrb[0].mxu0
  %v596 = vadd.f32 %v442, %v595
  %v597 = vpop.f32.mrb[0].mxu0
  %598 = vmatprep.mubr.f32.mxu0 0.0
  %599 = vmatmul.mubr.f32.gmra.mrb[0].mxu0 %v407
  %v600 = vpop.f32.mrb[0].mxu0
  %v601 = vadd.f32 %v442, %v600
  %v602 = vpop.f32.mrb[0].mxu0
  %603 = vmatprep.mubr.f32.mxu0 0.0
  %604 = vmatmul.mubr.f32.gmra.mrb[0].mxu0 %v408
  %v605 = vpop.f32.mrb[0].mxu0
  %v606 = vadd.f32 %v442, %v605
  %v607 = vpop.f32.mrb[0].mxu0
  %608 = vmatprep.mubr.f32.mxu0 0.0
  %609 = vmatmul.mubr.f32.gmra.mrb[0].mxu0 %v409
  %v610 = vpop.f32.mrb[0].mxu0
  %v611 = vadd.f32 %v442, %v610
  %v612 = vpop.f32.mrb[0].mxu0
  %613 = vmatprep.mubr.f32.mxu0 0.0
  %614 = vmatmul.mubr.f32.gmra.mrb[0].mxu0 %v410
  %v615 = vpop.f32.mrb[0].mxu0
  %v616 = vadd.f32 %v442, %v615
  %v617 = vpop.f32.mrb[0].mxu0
  %618 = vmatprep.mubr.f32.mxu0 0.0
  %619 = vmatmul.mubr.f32.gmra.mrb[0].mxu0 %v411
  %v620 = vpop.f32.mrb[0].mxu0
  %v621 = vadd.f32 %v442, %v620
  %v622 = vpop.f32.mrb[0].mxu0
  %623 = vmatprep.mubr.f32.mxu0 0.0
  %624 = vmatmul.mubr.f32.gmra.mrb[0].mxu0 %v412
  %v625 = vpop.f32.mrb[0].mxu0
  %v626 = vadd.f32 %v442, %v625
  %v627 = vpop.f32.mrb[0].mxu0
  %628 = vmatprep.mubr.f32.mxu0 0.0
  %629 = vmatmul.mubr.f32.gmra.mrb[0].mxu0 %v413
  %v630 = vpop.f32.mrb[0].mxu0
  %v631 = vadd.f32 %v442, %v630
  %v632 = vpop.f32.mrb[0].mxu0
  %633 = vmatprep.mubr.f32.mxu0 0.0
  %634 = vmatmul.mubr.f32.gmra.mrb[0].mxu0 %v414
  %v635 = vpop.f32.mrb[0].mxu0
  %v636 = vadd.f32 %v442, %v635
  %v637 = vpop.f32.mrb[0].mxu0
  %638 = vmatprep.mubr.f32.mxu0 0.0
  %639 = vmatmul.mubr.f32.gmra.mrb[0].mxu0 %v415
  %v640 = vpop.f32.mrb[0].mxu0
  %v641 = vadd.f32 %v442, %v640
  %v642 = vpop.f32.mrb[0].mxu0
  %643 = vmatprep.mubr.f32.mxu0 0.0
  %644 = vmatmul.mubr.f32.gmra.mrb[0].mxu0 %v416
  %v645 = vpop.f32.mrb[0].mxu0
  %v646 = vadd.f32 %v442, %v645
  %v647 = vpop.f32.mrb[0].mxu0
  %648 = vmatprep.mubr.f32.mxu0 0.0
  %649 = vmatmul.mubr.f32.gmra.mrb[0].mxu0 %v417
  %v650 = vpop.f32.mrb[0].mxu0
  %v651 = vadd.f32 %v442, %v650
  %v652 = vpop.f32.mrb[0].mxu0
  %653 = vmatprep.mubr.f32.mxu0 0.0
  %654 = vmatmul.mubr.f32.gmra.mrb[0].mxu0 %v418
  %v655 = vpop.f32.mrb[0].mxu0
  %v656 = vadd.f32 %v442, %v655
  %v657 = vpop.f32.mrb[0].mxu0
  %658 = vmatprep.mubr.f32.mxu0 0.0
  %659 = vmatmul.mubr.f32.gmra.mrb[0].mxu0 %v419
  %v660 = vpop.f32.mrb[0].mxu0
  %v661 = vadd.f32 %v442, %v660
  %v662 = vpop.f32.mrb[0].mxu0
  %663 = vmatprep.mubr.f32.mxu0 0.0
  %664 = vmatmul.mubr.f32.gmra.mrb[0].mxu0 %v420
  %v665 = vpop.f32.mrb[0].mxu0
  %v666 = vadd.f32 %v442, %v665
  %v667 = vpop.f32.mrb[0].mxu0
  %668 = vdwg.mxu0
  %v669 = vmax.f32 %v511, 0.0
  %v670 = vmax.f32 %v516, 0.0
  %v671 = vmax.f32 %v521, 0.0
  %v672 = vmax.f32 %v526, 0.0
  %v673 = vmax.f32 %v531, 0.0
  %v674 = vmax.f32 %v536, 0.0
  %v675 = vmax.f32 %v541, 0.0
  %v676 = vmax.f32 %v546, 0.0
  %v677 = vmax.f32 %v551, 0.0
  %v678 = vmax.f32 %v556, 0.0
  %v679 = vmax.f32 %v561, 0.0
  %v680 = vmax.f32 %v566, 0.0
  %v681 = vmax.f32 %v571, 0.0
  %v682 = vmax.f32 %v576, 0.0
  %v683 = vmax.f32 %v581, 0.0
  %v684 = vmax.f32 %v586, 0.0
  %v685 = vmax.f32 %v591, 0.0
  %v686 = vmax.f32 %v596, 0.0
  %v687 = vmax.f32 %v601, 0.0
  %v688 = vmax.f32 %v606, 0.0
  %v689 = vmax.f32 %v611, 0.0
  %v690 = vmax.f32 %v616, 0.0
  %v691 = vmax.f32 %v621, 0.0
  %v692 = vmax.f32 %v626, 0.0
  %v693 = vmax.f32 %v631, 0.0
  %v694 = vmax.f32 %v636, 0.0
  %v695 = vmax.f32 %v641, 0.0
  %v696 = vmax.f32 %v646, 0.0
  %v697 = vmax.f32 %v651, 0.0
  %v698 = vmax.f32 %v656, 0.0
  %v699 = vmax.f32 %v661, 0.0
  %v700 = vmax.f32 %v666, 0.0
  %v701 = vld [vmem:[%s5] sm:$0xff]
  %v702 = vld [vmem:[%s5 + $0x8] sm:$0xff]
  %v703 = vld [vmem:[%s5 + $0x10] sm:$0xff]
  %v704 = vld [vmem:[%s5 + $0x18] sm:$0xff]
  %v705 = vld [vmem:[%s5 + $0x20] sm:$0xff]
  %v706 = vld [vmem:[%s5 + $0x28] sm:$0xff]
  %v707 = vld [vmem:[%s5 + $0x30] sm:$0xff]
  %v708 = vld [vmem:[%s5 + $0x38] sm:$0xff]
  %v709 = vld [vmem:[%s5 + $0x40] sm:$0xff]
  %v710 = vld [vmem:[%s5 + $0x48] sm:$0xff]
  %v711 = vld [vmem:[%s5 + $0x50] sm:$0xff]
  %v712 = vld [vmem:[%s5 + $0x58] sm:$0xff]
  %v713 = vld [vmem:[%s5 + $0x60] sm:$0xff]
  %v714 = vld [vmem:[%s5 + $0x68] sm:$0xff]
  %v715 = vld [vmem:[%s5 + $0x70] sm:$0xff]
  %v716 = vld [vmem:[%s5 + $0x78] sm:$0xff]
  %v717 = vld [vmem:[%s6] sm:$0x1]
  %v719 = vlaneseq
  %v720 = vshrl.u32 %v719, 7
  %v721 = vsub.s32 0, %v720
  %v722 = vrot.slane %v717, %v721
  %724 = vmatprep.subr.mxu0 0.0
  %725 = vmatpush1.msra.mxu0 %v701
  %726 = vmatprep.subr.mxu0 0.0
  %727 = vmatpush1.msra.mxu0 %v702
  %728 = vmatprep.subr.mxu0 0.0
  %729 = vmatpush1.msra.mxu0 %v703
  %730 = vmatprep.subr.mxu0 0.0
  %731 = vmatpush1.msra.mxu0 %v704
  %732 = vmatprep.subr.mxu0 0.0
  %733 = vmatpush1.msra.mxu0 %v705
  %734 = vmatprep.subr.mxu0 0.0
  %735 = vmatpush1.msra.mxu0 %v706
  %736 = vmatprep.subr.mxu0 0.0
  %737 = vmatpush1.msra.mxu0 %v707
  %738 = vmatprep.subr.mxu0 0.0
  %739 = vmatpush1.msra.mxu0 %v708
  %740 = vmatprep.subr.mxu0 0.0
  %741 = vmatpush1.msra.mxu0 %v709
  %742 = vmatprep.subr.mxu0 0.0
  %743 = vmatpush1.msra.mxu0 %v710
  %744 = vmatprep.subr.mxu0 0.0
  %745 = vmatpush1.msra.mxu0 %v711
  %746 = vmatprep.subr.mxu0 0.0
  %747 = vmatpush1.msra.mxu0 %v712
  %748 = vmatprep.subr.mxu0 0.0
  %749 = vmatpush1.msra.mxu0 %v713
  %750 = vmatprep.subr.mxu0 0.0
  %751 = vmatpush1.msra.mxu0 %v714
  %752 = vmatprep.subr.mxu0 0.0
  %753 = vmatpush1.msra.mxu0 %v715
  %754 = vmatprep.subr.mxu0 0.0
  %755 = vmatpush1.msra.mxu0 %v716
  %756 = vmatprep.subr.mxu0 0.0
  %757 = vmatpush1.msra.mxu0 0.0
  %758 = vmatprep.subr.mxu0 0.0
  %759 = vmatpush1.msra.mxu0 0.0
  %760 = vmatprep.subr.mxu0 0.0
  %761 = vmatpush1.msra.mxu0 0.0
  %762 = vmatprep.subr.mxu0 0.0
  %763 = vmatpush1.msra.mxu0 0.0
  %764 = vmatprep.subr.mxu0 0.0
  %765 = vmatpush1.msra.mxu0 0.0
  %766 = vmatprep.subr.mxu0 0.0
  %767 = vmatpush1.msra.mxu0 0.0
  %768 = vmatprep.subr.mxu0 0.0
  %769 = vmatpush1.msra.mxu0 0.0
  %770 = vmatprep.subr.mxu0 0.0
  %771 = vmatpush1.msra.mxu0 0.0
  %772 = vmatprep.subr.mxu0 0.0
  %773 = vmatpush1.msra.mxu0 0.0
  %774 = vmatprep.subr.mxu0 0.0
  %775 = vmatpush1.msra.mxu0 0.0
  %776 = vmatprep.subr.mxu0 0.0
  %777 = vmatpush1.msra.mxu0 0.0
  %778 = vmatprep.subr.mxu0 0.0
  %779 = vmatpush1.msra.mxu0 0.0
  %780 = vmatprep.subr.mxu0 0.0
  %781 = vmatpush1.msra.mxu0 0.0
  %782 = vmatprep.subr.mxu0 0.0
  %783 = vmatpush1.msra.mxu0 0.0
  %784 = vmatprep.subr.mxu0 0.0
  %785 = vmatpush1.msra.mxu0 0.0
  %786 = vmatprep.subr.mxu0 0.0
  %787 = vmatpush1.msra.mxu0 0.0
  %788 = vmatprep.mubr.f32.mxu0 0.0
  %789 = vmatmul.mubr.f32.gmra.mrb[0].mxu0 %v669
  %v790 = vpop.f32.mrb[0].mxu0
  %v791 = vadd.f32 %v722, %v790
  %v792 = vpop.f32.mrb[0].mxu0
  %793 = vmatprep.mubr.f32.mxu0 0.0
  %794 = vmatmul.mubr.f32.gmra.mrb[0].mxu0 %v670
  %v795 = vpop.f32.mrb[0].mxu0
  %v796 = vadd.f32 %v722, %v795
  %v797 = vpop.f32.mrb[0].mxu0
  %798 = vmatprep.mubr.f32.mxu0 0.0
  %799 = vmatmul.mubr.f32.gmra.mrb[0].mxu0 %v671
  %v800 = vpop.f32.mrb[0].mxu0
  %v801 = vadd.f32 %v722, %v800
  %v802 = vpop.f32.mrb[0].mxu0
  %803 = vmatprep.mubr.f32.mxu0 0.0
  %804 = vmatmul.mubr.f32.gmra.mrb[0].mxu0 %v672
  %v805 = vpop.f32.mrb[0].mxu0
  %v806 = vadd.f32 %v722, %v805
  %v807 = vpop.f32.mrb[0].mxu0
  %808 = vmatprep.mubr.f32.mxu0 0.0
  %809 = vmatmul.mubr.f32.gmra.mrb[0].mxu0 %v673
  %v810 = vpop.f32.mrb[0].mxu0
  %v811 = vadd.f32 %v722, %v810
  %v812 = vpop.f32.mrb[0].mxu0
  %813 = vmatprep.mubr.f32.mxu0 0.0
  %814 = vmatmul.mubr.f32.gmra.mrb[0].mxu0 %v674
  %v815 = vpop.f32.mrb[0].mxu0
  %v816 = vadd.f32 %v722, %v815
  %v817 = vpop.f32.mrb[0].mxu0
  %818 = vmatprep.mubr.f32.mxu0 0.0
  %819 = vmatmul.mubr.f32.gmra.mrb[0].mxu0 %v675
  %v820 = vpop.f32.mrb[0].mxu0
  %v821 = vadd.f32 %v722, %v820
  %v822 = vpop.f32.mrb[0].mxu0
  %823 = vmatprep.mubr.f32.mxu0 0.0
  %824 = vmatmul.mubr.f32.gmra.mrb[0].mxu0 %v676
  %v825 = vpop.f32.mrb[0].mxu0
  %v826 = vadd.f32 %v722, %v825
  %v827 = vpop.f32.mrb[0].mxu0
  %828 = vmatprep.mubr.f32.mxu0 0.0
  %829 = vmatmul.mubr.f32.gmra.mrb[0].mxu0 %v677
  %v830 = vpop.f32.mrb[0].mxu0
  %v831 = vadd.f32 %v722, %v830
  %v832 = vpop.f32.mrb[0].mxu0
  %833 = vmatprep.mubr.f32.mxu0 0.0
  %834 = vmatmul.mubr.f32.gmra.mrb[0].mxu0 %v678
  %v835 = vpop.f32.mrb[0].mxu0
  %v836 = vadd.f32 %v722, %v835
  %v837 = vpop.f32.mrb[0].mxu0
  %838 = vmatprep.mubr.f32.mxu0 0.0
  %839 = vmatmul.mubr.f32.gmra.mrb[0].mxu0 %v679
  %v840 = vpop.f32.mrb[0].mxu0
  %v841 = vadd.f32 %v722, %v840
  %v842 = vpop.f32.mrb[0].mxu0
  %843 = vmatprep.mubr.f32.mxu0 0.0
  %844 = vmatmul.mubr.f32.gmra.mrb[0].mxu0 %v680
  %v845 = vpop.f32.mrb[0].mxu0
  %v846 = vadd.f32 %v722, %v845
  %v847 = vpop.f32.mrb[0].mxu0
  %848 = vmatprep.mubr.f32.mxu0 0.0
  %849 = vmatmul.mubr.f32.gmra.mrb[0].mxu0 %v681
  %v850 = vpop.f32.mrb[0].mxu0
  %v851 = vadd.f32 %v722, %v850
  %v852 = vpop.f32.mrb[0].mxu0
  %853 = vmatprep.mubr.f32.mxu0 0.0
  %854 = vmatmul.mubr.f32.gmra.mrb[0].mxu0 %v682
  %v855 = vpop.f32.mrb[0].mxu0
  %v856 = vadd.f32 %v722, %v855
  %v857 = vpop.f32.mrb[0].mxu0
  %858 = vmatprep.mubr.f32.mxu0 0.0
  %859 = vmatmul.mubr.f32.gmra.mrb[0].mxu0 %v683
  %v860 = vpop.f32.mrb[0].mxu0
  %v861 = vadd.f32 %v722, %v860
  %v862 = vpop.f32.mrb[0].mxu0
  %863 = vmatprep.mubr.f32.mxu0 0.0
  %864 = vmatmul.mubr.f32.gmra.mrb[0].mxu0 %v684
  %v865 = vpop.f32.mrb[0].mxu0
  %v866 = vadd.f32 %v722, %v865
  %v867 = vpop.f32.mrb[0].mxu0
  %868 = vmatprep.mubr.f32.mxu0 0.0
  %869 = vmatmul.mubr.f32.gmra.mrb[0].mxu0 %v685
  %v870 = vpop.f32.mrb[0].mxu0
  %v871 = vadd.f32 %v722, %v870
  %v872 = vpop.f32.mrb[0].mxu0
  %873 = vmatprep.mubr.f32.mxu0 0.0
  %874 = vmatmul.mubr.f32.gmra.mrb[0].mxu0 %v686
  %v875 = vpop.f32.mrb[0].mxu0
  %v876 = vadd.f32 %v722, %v875
  %v877 = vpop.f32.mrb[0].mxu0
  %878 = vmatprep.mubr.f32.mxu0 0.0
  %879 = vmatmul.mubr.f32.gmra.mrb[0].mxu0 %v687
  %v880 = vpop.f32.mrb[0].mxu0
  %v881 = vadd.f32 %v722, %v880
  %v882 = vpop.f32.mrb[0].mxu0
  %883 = vmatprep.mubr.f32.mxu0 0.0
  %884 = vmatmul.mubr.f32.gmra.mrb[0].mxu0 %v688
  %v885 = vpop.f32.mrb[0].mxu0
  %v886 = vadd.f32 %v722, %v885
  %v887 = vpop.f32.mrb[0].mxu0
  %888 = vmatprep.mubr.f32.mxu0 0.0
  %889 = vmatmul.mubr.f32.gmra.mrb[0].mxu0 %v689
  %v890 = vpop.f32.mrb[0].mxu0
  %v891 = vadd.f32 %v722, %v890
  %v892 = vpop.f32.mrb[0].mxu0
  %893 = vmatprep.mubr.f32.mxu0 0.0
  %894 = vmatmul.mubr.f32.gmra.mrb[0].mxu0 %v690
  %v895 = vpop.f32.mrb[0].mxu0
  %v896 = vadd.f32 %v722, %v895
  %v897 = vpop.f32.mrb[0].mxu0
  %898 = vmatprep.mubr.f32.mxu0 0.0
  %899 = vmatmul.mubr.f32.gmra.mrb[0].mxu0 %v691
  %v900 = vpop.f32.mrb[0].mxu0
  %v901 = vadd.f32 %v722, %v900
  %v902 = vpop.f32.mrb[0].mxu0
  %903 = vmatprep.mubr.f32.mxu0 0.0
  %904 = vmatmul.mubr.f32.gmra.mrb[0].mxu0 %v692
  %v905 = vpop.f32.mrb[0].mxu0
  %v906 = vadd.f32 %v722, %v905
  %v907 = vpop.f32.mrb[0].mxu0
  %908 = vmatprep.mubr.f32.mxu0 0.0
  %909 = vmatmul.mubr.f32.gmra.mrb[0].mxu0 %v693
  %v910 = vpop.f32.mrb[0].mxu0
  %v911 = vadd.f32 %v722, %v910
  %v912 = vpop.f32.mrb[0].mxu0
  %913 = vmatprep.mubr.f32.mxu0 0.0
  %914 = vmatmul.mubr.f32.gmra.mrb[0].mxu0 %v694
  %v915 = vpop.f32.mrb[0].mxu0
  %v916 = vadd.f32 %v722, %v915
  %v917 = vpop.f32.mrb[0].mxu0
  %918 = vmatprep.mubr.f32.mxu0 0.0
  %919 = vmatmul.mubr.f32.gmra.mrb[0].mxu0 %v695
  %v920 = vpop.f32.mrb[0].mxu0
  %v921 = vadd.f32 %v722, %v920
  %v922 = vpop.f32.mrb[0].mxu0
  %923 = vmatprep.mubr.f32.mxu0 0.0
  %924 = vmatmul.mubr.f32.gmra.mrb[0].mxu0 %v696
  %v925 = vpop.f32.mrb[0].mxu0
  %v926 = vadd.f32 %v722, %v925
  %v927 = vpop.f32.mrb[0].mxu0
  %928 = vmatprep.mubr.f32.mxu0 0.0
  %929 = vmatmul.mubr.f32.gmra.mrb[0].mxu0 %v697
  %v930 = vpop.f32.mrb[0].mxu0
  %v931 = vadd.f32 %v722, %v930
  %v932 = vpop.f32.mrb[0].mxu0
  %933 = vmatprep.mubr.f32.mxu0 0.0
  %934 = vmatmul.mubr.f32.gmra.mrb[0].mxu0 %v698
  %v935 = vpop.f32.mrb[0].mxu0
  %v936 = vadd.f32 %v722, %v935
  %v937 = vpop.f32.mrb[0].mxu0
  %938 = vmatprep.mubr.f32.mxu0 0.0
  %939 = vmatmul.mubr.f32.gmra.mrb[0].mxu0 %v699
  %v940 = vpop.f32.mrb[0].mxu0
  %v941 = vadd.f32 %v722, %v940
  %v942 = vpop.f32.mrb[0].mxu0
  %943 = vmatprep.mubr.f32.mxu0 0.0
  %944 = vmatmul.mubr.f32.gmra.mrb[0].mxu0 %v700
  %v945 = vpop.f32.mrb[0].mxu0
  %v946 = vadd.f32 %v722, %v945
  %v947 = vpop.f32.mrb[0].mxu0
  %948 = vdwg.mxu0
  %v949 = vmax.f32 %v791, 0.0
  %v950 = vmax.f32 %v796, 0.0
  %v951 = vmax.f32 %v801, 0.0
  %v952 = vmax.f32 %v806, 0.0
  %v953 = vmax.f32 %v811, 0.0
  %v954 = vmax.f32 %v816, 0.0
  %v955 = vmax.f32 %v821, 0.0
  %v956 = vmax.f32 %v826, 0.0
  %v957 = vmax.f32 %v831, 0.0
  %v958 = vmax.f32 %v836, 0.0
  %v959 = vmax.f32 %v841, 0.0
  %v960 = vmax.f32 %v846, 0.0
  %v961 = vmax.f32 %v851, 0.0
  %v962 = vmax.f32 %v856, 0.0
  %v963 = vmax.f32 %v861, 0.0
  %v964 = vmax.f32 %v866, 0.0
  %v965 = vmax.f32 %v871, 0.0
  %v966 = vmax.f32 %v876, 0.0
  %v967 = vmax.f32 %v881, 0.0
  %v968 = vmax.f32 %v886, 0.0
  %v969 = vmax.f32 %v891, 0.0
  %v970 = vmax.f32 %v896, 0.0
  %v971 = vmax.f32 %v901, 0.0
  %v972 = vmax.f32 %v906, 0.0
  %v973 = vmax.f32 %v911, 0.0
  %v974 = vmax.f32 %v916, 0.0
  %v975 = vmax.f32 %v921, 0.0
  %v976 = vmax.f32 %v926, 0.0
  %v977 = vmax.f32 %v931, 0.0
  %v978 = vmax.f32 %v936, 0.0
  %v979 = vmax.f32 %v941, 0.0
  %v980 = vmax.f32 %v946, 0.0
  %vm981 = vcmask 64512
  %982 = vst.msk [vmem:[%s7] sm:$0xff] %vm981, %v949
  %983 = vst.msk [vmem:[%s7 + $0x8] sm:$0xff] %vm981, %v950
  %984 = vst.msk [vmem:[%s7 + $0x10] sm:$0xff] %vm981, %v951
  %985 = vst.msk [vmem:[%s7 + $0x18] sm:$0xff] %vm981, %v952
  %986 = vst.msk [vmem:[%s7 + $0x20] sm:$0xff] %vm981, %v953
  %987 = vst.msk [vmem:[%s7 + $0x28] sm:$0xff] %vm981, %v954
  %988 = vst.msk [vmem:[%s7 + $0x30] sm:$0xff] %vm981, %v955
  %989 = vst.msk [vmem:[%s7 + $0x38] sm:$0xff] %vm981, %v956
  %990 = vst.msk [vmem:[%s7 + $0x40] sm:$0xff] %vm981, %v957
  %991 = vst.msk [vmem:[%s7 + $0x48] sm:$0xff] %vm981, %v958
  %992 = vst.msk [vmem:[%s7 + $0x50] sm:$0xff] %vm981, %v959
  %993 = vst.msk [vmem:[%s7 + $0x58] sm:$0xff] %vm981, %v960
  %994 = vst.msk [vmem:[%s7 + $0x60] sm:$0xff] %vm981, %v961
  %995 = vst.msk [vmem:[%s7 + $0x68] sm:$0xff] %vm981, %v962
  %996 = vst.msk [vmem:[%s7 + $0x70] sm:$0xff] %vm981, %v963
  %997 = vst.msk [vmem:[%s7 + $0x78] sm:$0xff] %vm981, %v964
  %998 = vst.msk [vmem:[%s7 + $0x80] sm:$0xff] %vm981, %v965
  %999 = vst.msk [vmem:[%s7 + $0x88] sm:$0xff] %vm981, %v966
  %1000 = vst.msk [vmem:[%s7 + $0x90] sm:$0xff] %vm981, %v967
  %1001 = vst.msk [vmem:[%s7 + $0x98] sm:$0xff] %vm981, %v968
  %1002 = vst.msk [vmem:[%s7 + $0xa0] sm:$0xff] %vm981, %v969
  %1003 = vst.msk [vmem:[%s7 + $0xa8] sm:$0xff] %vm981, %v970
  %1004 = vst.msk [vmem:[%s7 + $0xb0] sm:$0xff] %vm981, %v971
  %1005 = vst.msk [vmem:[%s7 + $0xb8] sm:$0xff] %vm981, %v972
  %1006 = vst.msk [vmem:[%s7 + $0xc0] sm:$0xff] %vm981, %v973
  %1007 = vst.msk [vmem:[%s7 + $0xc8] sm:$0xff] %vm981, %v974
  %1008 = vst.msk [vmem:[%s7 + $0xd0] sm:$0xff] %vm981, %v975
  %1009 = vst.msk [vmem:[%s7 + $0xd8] sm:$0xff] %vm981, %v976
  %1010 = vst.msk [vmem:[%s7 + $0xe0] sm:$0xff] %vm981, %v977
  %1011 = vst.msk [vmem:[%s7 + $0xe8] sm:$0xff] %vm981, %v978
  %1012 = vst.msk [vmem:[%s7 + $0xf0] sm:$0xff] %vm981, %v979
  %1013 = vst.msk [vmem:[%s7 + $0xf8] sm:$0xff] %vm981, %v980
  %v1014 = vld [vmem:[%s0 + $0x100] sm:$0xff]
  %v1015 = vld [vmem:[%s0 + $0x108] sm:$0xff]
  %v1016 = vld [vmem:[%s0 + $0x110] sm:$0xff]
  %v1017 = vld [vmem:[%s0 + $0x118] sm:$0xff]
  %v1018 = vld [vmem:[%s0 + $0x120] sm:$0xff]
  %v1019 = vld [vmem:[%s0 + $0x128] sm:$0xff]
  %v1020 = vld [vmem:[%s0 + $0x130] sm:$0xff]
  %v1021 = vld [vmem:[%s0 + $0x138] sm:$0xff]
  %v1022 = vld [vmem:[%s0 + $0x140] sm:$0xff]
  %v1023 = vld [vmem:[%s0 + $0x148] sm:$0xff]
  %v1024 = vld [vmem:[%s0 + $0x150] sm:$0xff]
  %v1025 = vld [vmem:[%s0 + $0x158] sm:$0xff]
  %v1026 = vld [vmem:[%s0 + $0x160] sm:$0xff]
  %v1027 = vld [vmem:[%s0 + $0x168] sm:$0xff]
  %v1028 = vld [vmem:[%s0 + $0x170] sm:$0xff]
  %v1029 = vld [vmem:[%s0 + $0x178] sm:$0xff]
  %v1030 = vld [vmem:[%s0 + $0x180] sm:$0xff]
  %v1031 = vld [vmem:[%s0 + $0x188] sm:$0xff]
  %v1032 = vld [vmem:[%s0 + $0x190] sm:$0xff]
  %v1033 = vld [vmem:[%s0 + $0x198] sm:$0xff]
  %v1034 = vld [vmem:[%s0 + $0x1a0] sm:$0xff]
  %v1035 = vld [vmem:[%s0 + $0x1a8] sm:$0xff]
  %v1036 = vld [vmem:[%s0 + $0x1b0] sm:$0xff]
  %v1037 = vld [vmem:[%s0 + $0x1b8] sm:$0xff]
  %v1038 = vld [vmem:[%s0 + $0x1c0] sm:$0xff]
  %v1039 = vld [vmem:[%s0 + $0x1c8] sm:$0xff]
  %v1040 = vld [vmem:[%s0 + $0x1d0] sm:$0xff]
  %v1041 = vld [vmem:[%s0 + $0x1d8] sm:$0xff]
  %v1042 = vld [vmem:[%s0 + $0x1e0] sm:$0xff]
  %v1043 = vld [vmem:[%s0 + $0x1e8] sm:$0xff]
  %v1044 = vld [vmem:[%s0 + $0x1f0] sm:$0xff]
  %v1045 = vld [vmem:[%s0 + $0x1f8] sm:$0xff]
  %v1046 = vld [vmem:[%s1] sm:$0xff]
  %v1047 = vld [vmem:[%s1 + $0x8] sm:$0xff]
  %v1048 = vld [vmem:[%s2] sm:$0x1]
  %v1050 = vlaneseq
  %v1051 = vshrl.u32 %v1050, 7
  %v1052 = vsub.s32 0, %v1051
  %v1053 = vrot.slane %v1048, %v1052
  %v1056 = vsel %vm67, %v1014, 0
  %v1059 = vsel %vm67, %v1015, 0
  %v1062 = vsel %vm67, %v1016, 0
  %v1065 = vsel %vm67, %v1017, 0
  %v1068 = vsel %vm67, %v1018, 0
  %v1071 = vsel %vm67, %v1019, 0
  %v1074 = vsel %vm67, %v1020, 0
  %v1077 = vsel %vm67, %v1021, 0
  %v1080 = vsel %vm67, %v1022, 0
  %v1083 = vsel %vm67, %v1023, 0
  %v1086 = vsel %vm67, %v1024, 0
  %v1089 = vsel %vm67, %v1025, 0
  %v1092 = vsel %vm67, %v1026, 0
  %v1095 = vsel %vm67, %v1027, 0
  %v1098 = vsel %vm67, %v1028, 0
  %v1101 = vsel %vm67, %v1029, 0
  %v1104 = vsel %vm67, %v1030, 0
  %v1107 = vsel %vm67, %v1031, 0
  %v1110 = vsel %vm67, %v1032, 0
  %v1113 = vsel %vm67, %v1033, 0
  %v1116 = vsel %vm67, %v1034, 0
  %v1119 = vsel %vm67, %v1035, 0
  %v1122 = vsel %vm67, %v1036, 0
  %v1125 = vsel %vm67, %v1037, 0
  %v1128 = vsel %vm67, %v1038, 0
  %v1131 = vsel %vm67, %v1039, 0
  %v1134 = vsel %vm67, %v1040, 0
  %v1137 = vsel %vm67, %v1041, 0
  %v1140 = vsel %vm67, %v1042, 0
  %v1143 = vsel %vm67, %v1043, 0
  %v1146 = vsel %vm67, %v1044, 0
  %v1149 = vsel %vm67, %v1045, 0
  %1151 = vmatprep.subr.mxu0 0.0
  %1152 = vmatpush1.msra.mxu0 %v1046
  %1153 = vmatprep.subr.mxu0 0.0
  %1154 = vmatpush1.msra.mxu0 %v1047
  %1155 = vmatprep.subr.mxu0 0.0
  %1156 = vmatpush1.msra.mxu0 0.0
  %1157 = vmatprep.subr.mxu0 0.0
  %1158 = vmatpush1.msra.mxu0 0.0
  %1159 = vmatprep.subr.mxu0 0.0
  %1160 = vmatpush1.msra.mxu0 0.0
  %1161 = vmatprep.subr.mxu0 0.0
  %1162 = vmatpush1.msra.mxu0 0.0
  %1163 = vmatprep.subr.mxu0 0.0
  %1164 = vmatpush1.msra.mxu0 0.0
  %1165 = vmatprep.subr.mxu0 0.0
  %1166 = vmatpush1.msra.mxu0 0.0
  %1167 = vmatprep.subr.mxu0 0.0
  %1168 = vmatpush1.msra.mxu0 0.0
  %1169 = vmatprep.subr.mxu0 0.0
  %1170 = vmatpush1.msra.mxu0 0.0
  %1171 = vmatprep.subr.mxu0 0.0
  %1172 = vmatpush1.msra.mxu0 0.0
  %1173 = vmatprep.subr.mxu0 0.0
  %1174 = vmatpush1.msra.mxu0 0.0
  %1175 = vmatprep.subr.mxu0 0.0
  %1176 = vmatpush1.msra.mxu0 0.0
  %1177 = vmatprep.subr.mxu0 0.0
  %1178 = vmatpush1.msra.mxu0 0.0
  %1179 = vmatprep.subr.mxu0 0.0
  %1180 = vmatpush1.msra.mxu0 0.0
  %1181 = vmatprep.subr.mxu0 0.0
  %1182 = vmatpush1.msra.mxu0 0.0
  %1183 = vmatprep.subr.mxu0 0.0
  %1184 = vmatpush1.msra.mxu0 0.0
  %1185 = vmatprep.subr.mxu0 0.0
  %1186 = vmatpush1.msra.mxu0 0.0
  %1187 = vmatprep.subr.mxu0 0.0
  %1188 = vmatpush1.msra.mxu0 0.0
  %1189 = vmatprep.subr.mxu0 0.0
  %1190 = vmatpush1.msra.mxu0 0.0
  %1191 = vmatprep.subr.mxu0 0.0
  %1192 = vmatpush1.msra.mxu0 0.0
  %1193 = vmatprep.subr.mxu0 0.0
  %1194 = vmatpush1.msra.mxu0 0.0
  %1195 = vmatprep.subr.mxu0 0.0
  %1196 = vmatpush1.msra.mxu0 0.0
  %1197 = vmatprep.subr.mxu0 0.0
  %1198 = vmatpush1.msra.mxu0 0.0
  %1199 = vmatprep.subr.mxu0 0.0
  %1200 = vmatpush1.msra.mxu0 0.0
  %1201 = vmatprep.subr.mxu0 0.0
  %1202 = vmatpush1.msra.mxu0 0.0
  %1203 = vmatprep.subr.mxu0 0.0
  %1204 = vmatpush1.msra.mxu0 0.0
  %1205 = vmatprep.subr.mxu0 0.0
  %1206 = vmatpush1.msra.mxu0 0.0
  %1207 = vmatprep.subr.mxu0 0.0
  %1208 = vmatpush1.msra.mxu0 0.0
  %1209 = vmatprep.subr.mxu0 0.0
  %1210 = vmatpush1.msra.mxu0 0.0
  %1211 = vmatprep.subr.mxu0 0.0
  %1212 = vmatpush1.msra.mxu0 0.0
  %1213 = vmatprep.subr.mxu0 0.0
  %1214 = vmatpush1.msra.mxu0 0.0
  %1215 = vmatprep.mubr.f32.mxu0 0.0
  %1216 = vmatmul.mubr.f32.gmra.mrb[0].mxu0 %v1056
  %v1217 = vpop.f32.mrb[0].mxu0
  %v1218 = vadd.f32 %v1053, %v1217
  %v1219 = vpop.f32.mrb[0].mxu0
  %1220 = vmatprep.mubr.f32.mxu0 0.0
  %1221 = vmatmul.mubr.f32.gmra.mrb[0].mxu0 %v1059
  %v1222 = vpop.f32.mrb[0].mxu0
  %v1223 = vadd.f32 %v1053, %v1222
  %v1224 = vpop.f32.mrb[0].mxu0
  %1225 = vmatprep.mubr.f32.mxu0 0.0
  %1226 = vmatmul.mubr.f32.gmra.mrb[0].mxu0 %v1062
  %v1227 = vpop.f32.mrb[0].mxu0
  %v1228 = vadd.f32 %v1053, %v1227
  %v1229 = vpop.f32.mrb[0].mxu0
  %1230 = vmatprep.mubr.f32.mxu0 0.0
  %1231 = vmatmul.mubr.f32.gmra.mrb[0].mxu0 %v1065
  %v1232 = vpop.f32.mrb[0].mxu0
  %v1233 = vadd.f32 %v1053, %v1232
  %v1234 = vpop.f32.mrb[0].mxu0
  %1235 = vmatprep.mubr.f32.mxu0 0.0
  %1236 = vmatmul.mubr.f32.gmra.mrb[0].mxu0 %v1068
  %v1237 = vpop.f32.mrb[0].mxu0
  %v1238 = vadd.f32 %v1053, %v1237
  %v1239 = vpop.f32.mrb[0].mxu0
  %1240 = vmatprep.mubr.f32.mxu0 0.0
  %1241 = vmatmul.mubr.f32.gmra.mrb[0].mxu0 %v1071
  %v1242 = vpop.f32.mrb[0].mxu0
  %v1243 = vadd.f32 %v1053, %v1242
  %v1244 = vpop.f32.mrb[0].mxu0
  %1245 = vmatprep.mubr.f32.mxu0 0.0
  %1246 = vmatmul.mubr.f32.gmra.mrb[0].mxu0 %v1074
  %v1247 = vpop.f32.mrb[0].mxu0
  %v1248 = vadd.f32 %v1053, %v1247
  %v1249 = vpop.f32.mrb[0].mxu0
  %1250 = vmatprep.mubr.f32.mxu0 0.0
  %1251 = vmatmul.mubr.f32.gmra.mrb[0].mxu0 %v1077
  %v1252 = vpop.f32.mrb[0].mxu0
  %v1253 = vadd.f32 %v1053, %v1252
  %v1254 = vpop.f32.mrb[0].mxu0
  %1255 = vmatprep.mubr.f32.mxu0 0.0
  %1256 = vmatmul.mubr.f32.gmra.mrb[0].mxu0 %v1080
  %v1257 = vpop.f32.mrb[0].mxu0
  %v1258 = vadd.f32 %v1053, %v1257
  %v1259 = vpop.f32.mrb[0].mxu0
  %1260 = vmatprep.mubr.f32.mxu0 0.0
  %1261 = vmatmul.mubr.f32.gmra.mrb[0].mxu0 %v1083
  %v1262 = vpop.f32.mrb[0].mxu0
  %v1263 = vadd.f32 %v1053, %v1262
  %v1264 = vpop.f32.mrb[0].mxu0
  %1265 = vmatprep.mubr.f32.mxu0 0.0
  %1266 = vmatmul.mubr.f32.gmra.mrb[0].mxu0 %v1086
  %v1267 = vpop.f32.mrb[0].mxu0
  %v1268 = vadd.f32 %v1053, %v1267
  %v1269 = vpop.f32.mrb[0].mxu0
  %1270 = vmatprep.mubr.f32.mxu0 0.0
  %1271 = vmatmul.mubr.f32.gmra.mrb[0].mxu0 %v1089
  %v1272 = vpop.f32.mrb[0].mxu0
  %v1273 = vadd.f32 %v1053, %v1272
  %v1274 = vpop.f32.mrb[0].mxu0
  %1275 = vmatprep.mubr.f32.mxu0 0.0
  %1276 = vmatmul.mubr.f32.gmra.mrb[0].mxu0 %v1092
  %v1277 = vpop.f32.mrb[0].mxu0
  %v1278 = vadd.f32 %v1053, %v1277
  %v1279 = vpop.f32.mrb[0].mxu0
  %1280 = vmatprep.mubr.f32.mxu0 0.0
  %1281 = vmatmul.mubr.f32.gmra.mrb[0].mxu0 %v1095
  %v1282 = vpop.f32.mrb[0].mxu0
  %v1283 = vadd.f32 %v1053, %v1282
  %v1284 = vpop.f32.mrb[0].mxu0
  %1285 = vmatprep.mubr.f32.mxu0 0.0
  %1286 = vmatmul.mubr.f32.gmra.mrb[0].mxu0 %v1098
  %v1287 = vpop.f32.mrb[0].mxu0
  %v1288 = vadd.f32 %v1053, %v1287
  %v1289 = vpop.f32.mrb[0].mxu0
  %1290 = vmatprep.mubr.f32.mxu0 0.0
  %1291 = vmatmul.mubr.f32.gmra.mrb[0].mxu0 %v1101
  %v1292 = vpop.f32.mrb[0].mxu0
  %v1293 = vadd.f32 %v1053, %v1292
  %v1294 = vpop.f32.mrb[0].mxu0
  %1295 = vmatprep.mubr.f32.mxu0 0.0
  %1296 = vmatmul.mubr.f32.gmra.mrb[0].mxu0 %v1104
  %v1297 = vpop.f32.mrb[0].mxu0
  %v1298 = vadd.f32 %v1053, %v1297
  %v1299 = vpop.f32.mrb[0].mxu0
  %1300 = vmatprep.mubr.f32.mxu0 0.0
  %1301 = vmatmul.mubr.f32.gmra.mrb[0].mxu0 %v1107
  %v1302 = vpop.f32.mrb[0].mxu0
  %v1303 = vadd.f32 %v1053, %v1302
  %v1304 = vpop.f32.mrb[0].mxu0
  %1305 = vmatprep.mubr.f32.mxu0 0.0
  %1306 = vmatmul.mubr.f32.gmra.mrb[0].mxu0 %v1110
  %v1307 = vpop.f32.mrb[0].mxu0
  %v1308 = vadd.f32 %v1053, %v1307
  %v1309 = vpop.f32.mrb[0].mxu0
  %1310 = vmatprep.mubr.f32.mxu0 0.0
  %1311 = vmatmul.mubr.f32.gmra.mrb[0].mxu0 %v1113
  %v1312 = vpop.f32.mrb[0].mxu0
  %v1313 = vadd.f32 %v1053, %v1312
  %v1314 = vpop.f32.mrb[0].mxu0
  %1315 = vmatprep.mubr.f32.mxu0 0.0
  %1316 = vmatmul.mubr.f32.gmra.mrb[0].mxu0 %v1116
  %v1317 = vpop.f32.mrb[0].mxu0
  %v1318 = vadd.f32 %v1053, %v1317
  %v1319 = vpop.f32.mrb[0].mxu0
  %1320 = vmatprep.mubr.f32.mxu0 0.0
  %1321 = vmatmul.mubr.f32.gmra.mrb[0].mxu0 %v1119
  %v1322 = vpop.f32.mrb[0].mxu0
  %v1323 = vadd.f32 %v1053, %v1322
  %v1324 = vpop.f32.mrb[0].mxu0
  %1325 = vmatprep.mubr.f32.mxu0 0.0
  %1326 = vmatmul.mubr.f32.gmra.mrb[0].mxu0 %v1122
  %v1327 = vpop.f32.mrb[0].mxu0
  %v1328 = vadd.f32 %v1053, %v1327
  %v1329 = vpop.f32.mrb[0].mxu0
  %1330 = vmatprep.mubr.f32.mxu0 0.0
  %1331 = vmatmul.mubr.f32.gmra.mrb[0].mxu0 %v1125
  %v1332 = vpop.f32.mrb[0].mxu0
  %v1333 = vadd.f32 %v1053, %v1332
  %v1334 = vpop.f32.mrb[0].mxu0
  %1335 = vmatprep.mubr.f32.mxu0 0.0
  %1336 = vmatmul.mubr.f32.gmra.mrb[0].mxu0 %v1128
  %v1337 = vpop.f32.mrb[0].mxu0
  %v1338 = vadd.f32 %v1053, %v1337
  %v1339 = vpop.f32.mrb[0].mxu0
  %1340 = vmatprep.mubr.f32.mxu0 0.0
  %1341 = vmatmul.mubr.f32.gmra.mrb[0].mxu0 %v1131
  %v1342 = vpop.f32.mrb[0].mxu0
  %v1343 = vadd.f32 %v1053, %v1342
  %v1344 = vpop.f32.mrb[0].mxu0
  %1345 = vmatprep.mubr.f32.mxu0 0.0
  %1346 = vmatmul.mubr.f32.gmra.mrb[0].mxu0 %v1134
  %v1347 = vpop.f32.mrb[0].mxu0
  %v1348 = vadd.f32 %v1053, %v1347
  %v1349 = vpop.f32.mrb[0].mxu0
  %1350 = vmatprep.mubr.f32.mxu0 0.0
  %1351 = vmatmul.mubr.f32.gmra.mrb[0].mxu0 %v1137
  %v1352 = vpop.f32.mrb[0].mxu0
  %v1353 = vadd.f32 %v1053, %v1352
  %v1354 = vpop.f32.mrb[0].mxu0
  %1355 = vmatprep.mubr.f32.mxu0 0.0
  %1356 = vmatmul.mubr.f32.gmra.mrb[0].mxu0 %v1140
  %v1357 = vpop.f32.mrb[0].mxu0
  %v1358 = vadd.f32 %v1053, %v1357
  %v1359 = vpop.f32.mrb[0].mxu0
  %1360 = vmatprep.mubr.f32.mxu0 0.0
  %1361 = vmatmul.mubr.f32.gmra.mrb[0].mxu0 %v1143
  %v1362 = vpop.f32.mrb[0].mxu0
  %v1363 = vadd.f32 %v1053, %v1362
  %v1364 = vpop.f32.mrb[0].mxu0
  %1365 = vmatprep.mubr.f32.mxu0 0.0
  %1366 = vmatmul.mubr.f32.gmra.mrb[0].mxu0 %v1146
  %v1367 = vpop.f32.mrb[0].mxu0
  %v1368 = vadd.f32 %v1053, %v1367
  %v1369 = vpop.f32.mrb[0].mxu0
  %1370 = vmatprep.mubr.f32.mxu0 0.0
  %1371 = vmatmul.mubr.f32.gmra.mrb[0].mxu0 %v1149
  %v1372 = vpop.f32.mrb[0].mxu0
  %v1373 = vadd.f32 %v1053, %v1372
  %v1374 = vpop.f32.mrb[0].mxu0
  %1375 = vdwg.mxu0
  %v1376 = vmax.f32 %v1218, 0.0
  %v1377 = vmax.f32 %v1223, 0.0
  %v1378 = vmax.f32 %v1228, 0.0
  %v1379 = vmax.f32 %v1233, 0.0
  %v1380 = vmax.f32 %v1238, 0.0
  %v1381 = vmax.f32 %v1243, 0.0
  %v1382 = vmax.f32 %v1248, 0.0
  %v1383 = vmax.f32 %v1253, 0.0
  %v1384 = vmax.f32 %v1258, 0.0
  %v1385 = vmax.f32 %v1263, 0.0
  %v1386 = vmax.f32 %v1268, 0.0
  %v1387 = vmax.f32 %v1273, 0.0
  %v1388 = vmax.f32 %v1278, 0.0
  %v1389 = vmax.f32 %v1283, 0.0
  %v1390 = vmax.f32 %v1288, 0.0
  %v1391 = vmax.f32 %v1293, 0.0
  %v1392 = vmax.f32 %v1298, 0.0
  %v1393 = vmax.f32 %v1303, 0.0
  %v1394 = vmax.f32 %v1308, 0.0
  %v1395 = vmax.f32 %v1313, 0.0
  %v1396 = vmax.f32 %v1318, 0.0
  %v1397 = vmax.f32 %v1323, 0.0
  %v1398 = vmax.f32 %v1328, 0.0
  %v1399 = vmax.f32 %v1333, 0.0
  %v1400 = vmax.f32 %v1338, 0.0
  %v1401 = vmax.f32 %v1343, 0.0
  %v1402 = vmax.f32 %v1348, 0.0
  %v1403 = vmax.f32 %v1353, 0.0
  %v1404 = vmax.f32 %v1358, 0.0
  %v1405 = vmax.f32 %v1363, 0.0
  %v1406 = vmax.f32 %v1368, 0.0
  %v1407 = vmax.f32 %v1373, 0.0
  %v1408 = vld [vmem:[%s3] sm:$0xff]
  %v1409 = vld [vmem:[%s3 + $0x8] sm:$0xff]
  %v1410 = vld [vmem:[%s3 + $0x10] sm:$0xff]
  %v1411 = vld [vmem:[%s3 + $0x18] sm:$0xff]
  %v1412 = vld [vmem:[%s3 + $0x20] sm:$0xff]
  %v1413 = vld [vmem:[%s3 + $0x28] sm:$0xff]
  %v1414 = vld [vmem:[%s3 + $0x30] sm:$0xff]
  %v1415 = vld [vmem:[%s3 + $0x38] sm:$0xff]
  %v1416 = vld [vmem:[%s3 + $0x40] sm:$0xff]
  %v1417 = vld [vmem:[%s3 + $0x48] sm:$0xff]
  %v1418 = vld [vmem:[%s3 + $0x50] sm:$0xff]
  %v1419 = vld [vmem:[%s3 + $0x58] sm:$0xff]
  %v1420 = vld [vmem:[%s3 + $0x60] sm:$0xff]
  %v1421 = vld [vmem:[%s3 + $0x68] sm:$0xff]
  %v1422 = vld [vmem:[%s3 + $0x70] sm:$0xff]
  %v1423 = vld [vmem:[%s3 + $0x78] sm:$0xff]
  %v1424 = vld [vmem:[%s4] sm:$0x1]
  %v1426 = vlaneseq
  %v1427 = vshrl.u32 %v1426, 7
  %v1428 = vsub.s32 0, %v1427
  %v1429 = vrot.slane %v1424, %v1428
  %1431 = vmatprep.subr.mxu0 0.0
  %1432 = vmatpush1.msra.mxu0 %v1408
  %1433 = vmatprep.subr.mxu0 0.0
  %1434 = vmatpush1.msra.mxu0 %v1409
  %1435 = vmatprep.subr.mxu0 0.0
  %1436 = vmatpush1.msra.mxu0 %v1410
  %1437 = vmatprep.subr.mxu0 0.0
  %1438 = vmatpush1.msra.mxu0 %v1411
  %1439 = vmatprep.subr.mxu0 0.0
  %1440 = vmatpush1.msra.mxu0 %v1412
  %1441 = vmatprep.subr.mxu0 0.0
  %1442 = vmatpush1.msra.mxu0 %v1413
  %1443 = vmatprep.subr.mxu0 0.0
  %1444 = vmatpush1.msra.mxu0 %v1414
  %1445 = vmatprep.subr.mxu0 0.0
  %1446 = vmatpush1.msra.mxu0 %v1415
  %1447 = vmatprep.subr.mxu0 0.0
  %1448 = vmatpush1.msra.mxu0 %v1416
  %1449 = vmatprep.subr.mxu0 0.0
  %1450 = vmatpush1.msra.mxu0 %v1417
  %1451 = vmatprep.subr.mxu0 0.0
  %1452 = vmatpush1.msra.mxu0 %v1418
  %1453 = vmatprep.subr.mxu0 0.0
  %1454 = vmatpush1.msra.mxu0 %v1419
  %1455 = vmatprep.subr.mxu0 0.0
  %1456 = vmatpush1.msra.mxu0 %v1420
  %1457 = vmatprep.subr.mxu0 0.0
  %1458 = vmatpush1.msra.mxu0 %v1421
  %1459 = vmatprep.subr.mxu0 0.0
  %1460 = vmatpush1.msra.mxu0 %v1422
  %1461 = vmatprep.subr.mxu0 0.0
  %1462 = vmatpush1.msra.mxu0 %v1423
  %1463 = vmatprep.subr.mxu0 0.0
  %1464 = vmatpush1.msra.mxu0 0.0
  %1465 = vmatprep.subr.mxu0 0.0
  %1466 = vmatpush1.msra.mxu0 0.0
  %1467 = vmatprep.subr.mxu0 0.0
  %1468 = vmatpush1.msra.mxu0 0.0
  %1469 = vmatprep.subr.mxu0 0.0
  %1470 = vmatpush1.msra.mxu0 0.0
  %1471 = vmatprep.subr.mxu0 0.0
  %1472 = vmatpush1.msra.mxu0 0.0
  %1473 = vmatprep.subr.mxu0 0.0
  %1474 = vmatpush1.msra.mxu0 0.0
  %1475 = vmatprep.subr.mxu0 0.0
  %1476 = vmatpush1.msra.mxu0 0.0
  %1477 = vmatprep.subr.mxu0 0.0
  %1478 = vmatpush1.msra.mxu0 0.0
  %1479 = vmatprep.subr.mxu0 0.0
  %1480 = vmatpush1.msra.mxu0 0.0
  %1481 = vmatprep.subr.mxu0 0.0
  %1482 = vmatpush1.msra.mxu0 0.0
  %1483 = vmatprep.subr.mxu0 0.0
  %1484 = vmatpush1.msra.mxu0 0.0
  %1485 = vmatprep.subr.mxu0 0.0
  %1486 = vmatpush1.msra.mxu0 0.0
  %1487 = vmatprep.subr.mxu0 0.0
  %1488 = vmatpush1.msra.mxu0 0.0
  %1489 = vmatprep.subr.mxu0 0.0
  %1490 = vmatpush1.msra.mxu0 0.0
  %1491 = vmatprep.subr.mxu0 0.0
  %1492 = vmatpush1.msra.mxu0 0.0
  %1493 = vmatprep.subr.mxu0 0.0
  %1494 = vmatpush1.msra.mxu0 0.0
  %1495 = vmatprep.mubr.f32.mxu0 0.0
  %1496 = vmatmul.mubr.f32.gmra.mrb[0].mxu0 %v1376
  %v1497 = vpop.f32.mrb[0].mxu0
  %v1498 = vadd.f32 %v1429, %v1497
  %v1499 = vpop.f32.mrb[0].mxu0
  %1500 = vmatprep.mubr.f32.mxu0 0.0
  %1501 = vmatmul.mubr.f32.gmra.mrb[0].mxu0 %v1377
  %v1502 = vpop.f32.mrb[0].mxu0
  %v1503 = vadd.f32 %v1429, %v1502
  %v1504 = vpop.f32.mrb[0].mxu0
  %1505 = vmatprep.mubr.f32.mxu0 0.0
  %1506 = vmatmul.mubr.f32.gmra.mrb[0].mxu0 %v1378
  %v1507 = vpop.f32.mrb[0].mxu0
  %v1508 = vadd.f32 %v1429, %v1507
  %v1509 = vpop.f32.mrb[0].mxu0
  %1510 = vmatprep.mubr.f32.mxu0 0.0
  %1511 = vmatmul.mubr.f32.gmra.mrb[0].mxu0 %v1379
  %v1512 = vpop.f32.mrb[0].mxu0
  %v1513 = vadd.f32 %v1429, %v1512
  %v1514 = vpop.f32.mrb[0].mxu0
  %1515 = vmatprep.mubr.f32.mxu0 0.0
  %1516 = vmatmul.mubr.f32.gmra.mrb[0].mxu0 %v1380
  %v1517 = vpop.f32.mrb[0].mxu0
  %v1518 = vadd.f32 %v1429, %v1517
  %v1519 = vpop.f32.mrb[0].mxu0
  %1520 = vmatprep.mubr.f32.mxu0 0.0
  %1521 = vmatmul.mubr.f32.gmra.mrb[0].mxu0 %v1381
  %v1522 = vpop.f32.mrb[0].mxu0
  %v1523 = vadd.f32 %v1429, %v1522
  %v1524 = vpop.f32.mrb[0].mxu0
  %1525 = vmatprep.mubr.f32.mxu0 0.0
  %1526 = vmatmul.mubr.f32.gmra.mrb[0].mxu0 %v1382
  %v1527 = vpop.f32.mrb[0].mxu0
  %v1528 = vadd.f32 %v1429, %v1527
  %v1529 = vpop.f32.mrb[0].mxu0
  %1530 = vmatprep.mubr.f32.mxu0 0.0
  %1531 = vmatmul.mubr.f32.gmra.mrb[0].mxu0 %v1383
  %v1532 = vpop.f32.mrb[0].mxu0
  %v1533 = vadd.f32 %v1429, %v1532
  %v1534 = vpop.f32.mrb[0].mxu0
  %1535 = vmatprep.mubr.f32.mxu0 0.0
  %1536 = vmatmul.mubr.f32.gmra.mrb[0].mxu0 %v1384
  %v1537 = vpop.f32.mrb[0].mxu0
  %v1538 = vadd.f32 %v1429, %v1537
  %v1539 = vpop.f32.mrb[0].mxu0
  %1540 = vmatprep.mubr.f32.mxu0 0.0
  %1541 = vmatmul.mubr.f32.gmra.mrb[0].mxu0 %v1385
  %v1542 = vpop.f32.mrb[0].mxu0
  %v1543 = vadd.f32 %v1429, %v1542
  %v1544 = vpop.f32.mrb[0].mxu0
  %1545 = vmatprep.mubr.f32.mxu0 0.0
  %1546 = vmatmul.mubr.f32.gmra.mrb[0].mxu0 %v1386
  %v1547 = vpop.f32.mrb[0].mxu0
  %v1548 = vadd.f32 %v1429, %v1547
  %v1549 = vpop.f32.mrb[0].mxu0
  %1550 = vmatprep.mubr.f32.mxu0 0.0
  %1551 = vmatmul.mubr.f32.gmra.mrb[0].mxu0 %v1387
  %v1552 = vpop.f32.mrb[0].mxu0
  %v1553 = vadd.f32 %v1429, %v1552
  %v1554 = vpop.f32.mrb[0].mxu0
  %1555 = vmatprep.mubr.f32.mxu0 0.0
  %1556 = vmatmul.mubr.f32.gmra.mrb[0].mxu0 %v1388
  %v1557 = vpop.f32.mrb[0].mxu0
  %v1558 = vadd.f32 %v1429, %v1557
  %v1559 = vpop.f32.mrb[0].mxu0
  %1560 = vmatprep.mubr.f32.mxu0 0.0
  %1561 = vmatmul.mubr.f32.gmra.mrb[0].mxu0 %v1389
  %v1562 = vpop.f32.mrb[0].mxu0
  %v1563 = vadd.f32 %v1429, %v1562
  %v1564 = vpop.f32.mrb[0].mxu0
  %1565 = vmatprep.mubr.f32.mxu0 0.0
  %1566 = vmatmul.mubr.f32.gmra.mrb[0].mxu0 %v1390
  %v1567 = vpop.f32.mrb[0].mxu0
  %v1568 = vadd.f32 %v1429, %v1567
  %v1569 = vpop.f32.mrb[0].mxu0
  %1570 = vmatprep.mubr.f32.mxu0 0.0
  %1571 = vmatmul.mubr.f32.gmra.mrb[0].mxu0 %v1391
  %v1572 = vpop.f32.mrb[0].mxu0
  %v1573 = vadd.f32 %v1429, %v1572
  %v1574 = vpop.f32.mrb[0].mxu0
  %1575 = vmatprep.mubr.f32.mxu0 0.0
  %1576 = vmatmul.mubr.f32.gmra.mrb[0].mxu0 %v1392
  %v1577 = vpop.f32.mrb[0].mxu0
  %v1578 = vadd.f32 %v1429, %v1577
  %v1579 = vpop.f32.mrb[0].mxu0
  %1580 = vmatprep.mubr.f32.mxu0 0.0
  %1581 = vmatmul.mubr.f32.gmra.mrb[0].mxu0 %v1393
  %v1582 = vpop.f32.mrb[0].mxu0
  %v1583 = vadd.f32 %v1429, %v1582
  %v1584 = vpop.f32.mrb[0].mxu0
  %1585 = vmatprep.mubr.f32.mxu0 0.0
  %1586 = vmatmul.mubr.f32.gmra.mrb[0].mxu0 %v1394
  %v1587 = vpop.f32.mrb[0].mxu0
  %v1588 = vadd.f32 %v1429, %v1587
  %v1589 = vpop.f32.mrb[0].mxu0
  %1590 = vmatprep.mubr.f32.mxu0 0.0
  %1591 = vmatmul.mubr.f32.gmra.mrb[0].mxu0 %v1395
  %v1592 = vpop.f32.mrb[0].mxu0
  %v1593 = vadd.f32 %v1429, %v1592
  %v1594 = vpop.f32.mrb[0].mxu0
  %1595 = vmatprep.mubr.f32.mxu0 0.0
  %1596 = vmatmul.mubr.f32.gmra.mrb[0].mxu0 %v1396
  %v1597 = vpop.f32.mrb[0].mxu0
  %v1598 = vadd.f32 %v1429, %v1597
  %v1599 = vpop.f32.mrb[0].mxu0
  %1600 = vmatprep.mubr.f32.mxu0 0.0
  %1601 = vmatmul.mubr.f32.gmra.mrb[0].mxu0 %v1397
  %v1602 = vpop.f32.mrb[0].mxu0
  %v1603 = vadd.f32 %v1429, %v1602
  %v1604 = vpop.f32.mrb[0].mxu0
  %1605 = vmatprep.mubr.f32.mxu0 0.0
  %1606 = vmatmul.mubr.f32.gmra.mrb[0].mxu0 %v1398
  %v1607 = vpop.f32.mrb[0].mxu0
  %v1608 = vadd.f32 %v1429, %v1607
  %v1609 = vpop.f32.mrb[0].mxu0
  %1610 = vmatprep.mubr.f32.mxu0 0.0
  %1611 = vmatmul.mubr.f32.gmra.mrb[0].mxu0 %v1399
  %v1612 = vpop.f32.mrb[0].mxu0
  %v1613 = vadd.f32 %v1429, %v1612
  %v1614 = vpop.f32.mrb[0].mxu0
  %1615 = vmatprep.mubr.f32.mxu0 0.0
  %1616 = vmatmul.mubr.f32.gmra.mrb[0].mxu0 %v1400
  %v1617 = vpop.f32.mrb[0].mxu0
  %v1618 = vadd.f32 %v1429, %v1617
  %v1619 = vpop.f32.mrb[0].mxu0
  %1620 = vmatprep.mubr.f32.mxu0 0.0
  %1621 = vmatmul.mubr.f32.gmra.mrb[0].mxu0 %v1401
  %v1622 = vpop.f32.mrb[0].mxu0
  %v1623 = vadd.f32 %v1429, %v1622
  %v1624 = vpop.f32.mrb[0].mxu0
  %1625 = vmatprep.mubr.f32.mxu0 0.0
  %1626 = vmatmul.mubr.f32.gmra.mrb[0].mxu0 %v1402
  %v1627 = vpop.f32.mrb[0].mxu0
  %v1628 = vadd.f32 %v1429, %v1627
  %v1629 = vpop.f32.mrb[0].mxu0
  %1630 = vmatprep.mubr.f32.mxu0 0.0
  %1631 = vmatmul.mubr.f32.gmra.mrb[0].mxu0 %v1403
  %v1632 = vpop.f32.mrb[0].mxu0
  %v1633 = vadd.f32 %v1429, %v1632
  %v1634 = vpop.f32.mrb[0].mxu0
  %1635 = vmatprep.mubr.f32.mxu0 0.0
  %1636 = vmatmul.mubr.f32.gmra.mrb[0].mxu0 %v1404
  %v1637 = vpop.f32.mrb[0].mxu0
  %v1638 = vadd.f32 %v1429, %v1637
  %v1639 = vpop.f32.mrb[0].mxu0
  %1640 = vmatprep.mubr.f32.mxu0 0.0
  %1641 = vmatmul.mubr.f32.gmra.mrb[0].mxu0 %v1405
  %v1642 = vpop.f32.mrb[0].mxu0
  %v1643 = vadd.f32 %v1429, %v1642
  %v1644 = vpop.f32.mrb[0].mxu0
  %1645 = vmatprep.mubr.f32.mxu0 0.0
  %1646 = vmatmul.mubr.f32.gmra.mrb[0].mxu0 %v1406
  %v1647 = vpop.f32.mrb[0].mxu0
  %v1648 = vadd.f32 %v1429, %v1647
  %v1649 = vpop.f32.mrb[0].mxu0
  %1650 = vmatprep.mubr.f32.mxu0 0.0
  %1651 = vmatmul.mubr.f32.gmra.mrb[0].mxu0 %v1407
  %v1652 = vpop.f32.mrb[0].mxu0
  %v1653 = vadd.f32 %v1429, %v1652
  %v1654 = vpop.f32.mrb[0].mxu0
  %1655 = vdwg.mxu0
  %v1656 = vmax.f32 %v1498, 0.0
  %v1657 = vmax.f32 %v1503, 0.0
  %v1658 = vmax.f32 %v1508, 0.0
  %v1659 = vmax.f32 %v1513, 0.0
  %v1660 = vmax.f32 %v1518, 0.0
  %v1661 = vmax.f32 %v1523, 0.0
  %v1662 = vmax.f32 %v1528, 0.0
  %v1663 = vmax.f32 %v1533, 0.0
  %v1664 = vmax.f32 %v1538, 0.0
  %v1665 = vmax.f32 %v1543, 0.0
  %v1666 = vmax.f32 %v1548, 0.0
  %v1667 = vmax.f32 %v1553, 0.0
  %v1668 = vmax.f32 %v1558, 0.0
  %v1669 = vmax.f32 %v1563, 0.0
  %v1670 = vmax.f32 %v1568, 0.0
  %v1671 = vmax.f32 %v1573, 0.0
  %v1672 = vmax.f32 %v1578, 0.0
  %v1673 = vmax.f32 %v1583, 0.0
  %v1674 = vmax.f32 %v1588, 0.0
  %v1675 = vmax.f32 %v1593, 0.0
  %v1676 = vmax.f32 %v1598, 0.0
  %v1677 = vmax.f32 %v1603, 0.0
  %v1678 = vmax.f32 %v1608, 0.0
  %v1679 = vmax.f32 %v1613, 0.0
  %v1680 = vmax.f32 %v1618, 0.0
  %v1681 = vmax.f32 %v1623, 0.0
  %v1682 = vmax.f32 %v1628, 0.0
  %v1683 = vmax.f32 %v1633, 0.0
  %v1684 = vmax.f32 %v1638, 0.0
  %v1685 = vmax.f32 %v1643, 0.0
  %v1686 = vmax.f32 %v1648, 0.0
  %v1687 = vmax.f32 %v1653, 0.0
  %v1688 = vld [vmem:[%s5] sm:$0xff]
  %v1689 = vld [vmem:[%s5 + $0x8] sm:$0xff]
  %v1690 = vld [vmem:[%s5 + $0x10] sm:$0xff]
  %v1691 = vld [vmem:[%s5 + $0x18] sm:$0xff]
  %v1692 = vld [vmem:[%s5 + $0x20] sm:$0xff]
  %v1693 = vld [vmem:[%s5 + $0x28] sm:$0xff]
  %v1694 = vld [vmem:[%s5 + $0x30] sm:$0xff]
  %v1695 = vld [vmem:[%s5 + $0x38] sm:$0xff]
  %v1696 = vld [vmem:[%s5 + $0x40] sm:$0xff]
  %v1697 = vld [vmem:[%s5 + $0x48] sm:$0xff]
  %v1698 = vld [vmem:[%s5 + $0x50] sm:$0xff]
  %v1699 = vld [vmem:[%s5 + $0x58] sm:$0xff]
  %v1700 = vld [vmem:[%s5 + $0x60] sm:$0xff]
  %v1701 = vld [vmem:[%s5 + $0x68] sm:$0xff]
  %v1702 = vld [vmem:[%s5 + $0x70] sm:$0xff]
  %v1703 = vld [vmem:[%s5 + $0x78] sm:$0xff]
  %v1704 = vld [vmem:[%s6] sm:$0x1]
  %v1706 = vlaneseq
  %v1707 = vshrl.u32 %v1706, 7
  %v1708 = vsub.s32 0, %v1707
  %v1709 = vrot.slane %v1704, %v1708
  %1711 = vmatprep.subr.mxu0 0.0
  %1712 = vmatpush1.msra.mxu0 %v1688
  %1713 = vmatprep.subr.mxu0 0.0
  %1714 = vmatpush1.msra.mxu0 %v1689
  %1715 = vmatprep.subr.mxu0 0.0
  %1716 = vmatpush1.msra.mxu0 %v1690
  %1717 = vmatprep.subr.mxu0 0.0
  %1718 = vmatpush1.msra.mxu0 %v1691
  %1719 = vmatprep.subr.mxu0 0.0
  %1720 = vmatpush1.msra.mxu0 %v1692
  %1721 = vmatprep.subr.mxu0 0.0
  %1722 = vmatpush1.msra.mxu0 %v1693
  %1723 = vmatprep.subr.mxu0 0.0
  %1724 = vmatpush1.msra.mxu0 %v1694
  %1725 = vmatprep.subr.mxu0 0.0
  %1726 = vmatpush1.msra.mxu0 %v1695
  %1727 = vmatprep.subr.mxu0 0.0
  %1728 = vmatpush1.msra.mxu0 %v1696
  %1729 = vmatprep.subr.mxu0 0.0
  %1730 = vmatpush1.msra.mxu0 %v1697
  %1731 = vmatprep.subr.mxu0 0.0
  %1732 = vmatpush1.msra.mxu0 %v1698
  %1733 = vmatprep.subr.mxu0 0.0
  %1734 = vmatpush1.msra.mxu0 %v1699
  %1735 = vmatprep.subr.mxu0 0.0
  %1736 = vmatpush1.msra.mxu0 %v1700
  %1737 = vmatprep.subr.mxu0 0.0
  %1738 = vmatpush1.msra.mxu0 %v1701
  %1739 = vmatprep.subr.mxu0 0.0
  %1740 = vmatpush1.msra.mxu0 %v1702
  %1741 = vmatprep.subr.mxu0 0.0
  %1742 = vmatpush1.msra.mxu0 %v1703
  %1743 = vmatprep.subr.mxu0 0.0
  %1744 = vmatpush1.msra.mxu0 0.0
  %1745 = vmatprep.subr.mxu0 0.0
  %1746 = vmatpush1.msra.mxu0 0.0
  %1747 = vmatprep.subr.mxu0 0.0
  %1748 = vmatpush1.msra.mxu0 0.0
  %1749 = vmatprep.subr.mxu0 0.0
  %1750 = vmatpush1.msra.mxu0 0.0
  %1751 = vmatprep.subr.mxu0 0.0
  %1752 = vmatpush1.msra.mxu0 0.0
  %1753 = vmatprep.subr.mxu0 0.0
  %1754 = vmatpush1.msra.mxu0 0.0
  %1755 = vmatprep.subr.mxu0 0.0
  %1756 = vmatpush1.msra.mxu0 0.0
  %1757 = vmatprep.subr.mxu0 0.0
  %1758 = vmatpush1.msra.mxu0 0.0
  %1759 = vmatprep.subr.mxu0 0.0
  %1760 = vmatpush1.msra.mxu0 0.0
  %1761 = vmatprep.subr.mxu0 0.0
  %1762 = vmatpush1.msra.mxu0 0.0
  %1763 = vmatprep.subr.mxu0 0.0
  %1764 = vmatpush1.msra.mxu0 0.0
  %1765 = vmatprep.subr.mxu0 0.0
  %1766 = vmatpush1.msra.mxu0 0.0
  %1767 = vmatprep.subr.mxu0 0.0
  %1768 = vmatpush1.msra.mxu0 0.0
  %1769 = vmatprep.subr.mxu0 0.0
  %1770 = vmatpush1.msra.mxu0 0.0
  %1771 = vmatprep.subr.mxu0 0.0
  %1772 = vmatpush1.msra.mxu0 0.0
  %1773 = vmatprep.subr.mxu0 0.0
  %1774 = vmatpush1.msra.mxu0 0.0
  %1775 = vmatprep.mubr.f32.mxu0 0.0
  %1776 = vmatmul.mubr.f32.gmra.mrb[0].mxu0 %v1656
  %v1777 = vpop.f32.mrb[0].mxu0
  %v1778 = vadd.f32 %v1709, %v1777
  %v1779 = vpop.f32.mrb[0].mxu0
  %1780 = vmatprep.mubr.f32.mxu0 0.0
  %1781 = vmatmul.mubr.f32.gmra.mrb[0].mxu0 %v1657
  %v1782 = vpop.f32.mrb[0].mxu0
  %v1783 = vadd.f32 %v1709, %v1782
  %v1784 = vpop.f32.mrb[0].mxu0
  %1785 = vmatprep.mubr.f32.mxu0 0.0
  %1786 = vmatmul.mubr.f32.gmra.mrb[0].mxu0 %v1658
  %v1787 = vpop.f32.mrb[0].mxu0
  %v1788 = vadd.f32 %v1709, %v1787
  %v1789 = vpop.f32.mrb[0].mxu0
  %1790 = vmatprep.mubr.f32.mxu0 0.0
  %1791 = vmatmul.mubr.f32.gmra.mrb[0].mxu0 %v1659
  %v1792 = vpop.f32.mrb[0].mxu0
  %v1793 = vadd.f32 %v1709, %v1792
  %v1794 = vpop.f32.mrb[0].mxu0
  %1795 = vmatprep.mubr.f32.mxu0 0.0
  %1796 = vmatmul.mubr.f32.gmra.mrb[0].mxu0 %v1660
  %v1797 = vpop.f32.mrb[0].mxu0
  %v1798 = vadd.f32 %v1709, %v1797
  %v1799 = vpop.f32.mrb[0].mxu0
  %1800 = vmatprep.mubr.f32.mxu0 0.0
  %1801 = vmatmul.mubr.f32.gmra.mrb[0].mxu0 %v1661
  %v1802 = vpop.f32.mrb[0].mxu0
  %v1803 = vadd.f32 %v1709, %v1802
  %v1804 = vpop.f32.mrb[0].mxu0
  %1805 = vmatprep.mubr.f32.mxu0 0.0
  %1806 = vmatmul.mubr.f32.gmra.mrb[0].mxu0 %v1662
  %v1807 = vpop.f32.mrb[0].mxu0
  %v1808 = vadd.f32 %v1709, %v1807
  %v1809 = vpop.f32.mrb[0].mxu0
  %1810 = vmatprep.mubr.f32.mxu0 0.0
  %1811 = vmatmul.mubr.f32.gmra.mrb[0].mxu0 %v1663
  %v1812 = vpop.f32.mrb[0].mxu0
  %v1813 = vadd.f32 %v1709, %v1812
  %v1814 = vpop.f32.mrb[0].mxu0
  %1815 = vmatprep.mubr.f32.mxu0 0.0
  %1816 = vmatmul.mubr.f32.gmra.mrb[0].mxu0 %v1664
  %v1817 = vpop.f32.mrb[0].mxu0
  %v1818 = vadd.f32 %v1709, %v1817
  %v1819 = vpop.f32.mrb[0].mxu0
  %1820 = vmatprep.mubr.f32.mxu0 0.0
  %1821 = vmatmul.mubr.f32.gmra.mrb[0].mxu0 %v1665
  %v1822 = vpop.f32.mrb[0].mxu0
  %v1823 = vadd.f32 %v1709, %v1822
  %v1824 = vpop.f32.mrb[0].mxu0
  %1825 = vmatprep.mubr.f32.mxu0 0.0
  %1826 = vmatmul.mubr.f32.gmra.mrb[0].mxu0 %v1666
  %v1827 = vpop.f32.mrb[0].mxu0
  %v1828 = vadd.f32 %v1709, %v1827
  %v1829 = vpop.f32.mrb[0].mxu0
  %1830 = vmatprep.mubr.f32.mxu0 0.0
  %1831 = vmatmul.mubr.f32.gmra.mrb[0].mxu0 %v1667
  %v1832 = vpop.f32.mrb[0].mxu0
  %v1833 = vadd.f32 %v1709, %v1832
  %v1834 = vpop.f32.mrb[0].mxu0
  %1835 = vmatprep.mubr.f32.mxu0 0.0
  %1836 = vmatmul.mubr.f32.gmra.mrb[0].mxu0 %v1668
  %v1837 = vpop.f32.mrb[0].mxu0
  %v1838 = vadd.f32 %v1709, %v1837
  %v1839 = vpop.f32.mrb[0].mxu0
  %1840 = vmatprep.mubr.f32.mxu0 0.0
  %1841 = vmatmul.mubr.f32.gmra.mrb[0].mxu0 %v1669
  %v1842 = vpop.f32.mrb[0].mxu0
  %v1843 = vadd.f32 %v1709, %v1842
  %v1844 = vpop.f32.mrb[0].mxu0
  %1845 = vmatprep.mubr.f32.mxu0 0.0
  %1846 = vmatmul.mubr.f32.gmra.mrb[0].mxu0 %v1670
  %v1847 = vpop.f32.mrb[0].mxu0
  %v1848 = vadd.f32 %v1709, %v1847
  %v1849 = vpop.f32.mrb[0].mxu0
  %1850 = vmatprep.mubr.f32.mxu0 0.0
  %1851 = vmatmul.mubr.f32.gmra.mrb[0].mxu0 %v1671
  %v1852 = vpop.f32.mrb[0].mxu0
  %v1853 = vadd.f32 %v1709, %v1852
  %v1854 = vpop.f32.mrb[0].mxu0
  %1855 = vmatprep.mubr.f32.mxu0 0.0
  %1856 = vmatmul.mubr.f32.gmra.mrb[0].mxu0 %v1672
  %v1857 = vpop.f32.mrb[0].mxu0
  %v1858 = vadd.f32 %v1709, %v1857
  %v1859 = vpop.f32.mrb[0].mxu0
  %1860 = vmatprep.mubr.f32.mxu0 0.0
  %1861 = vmatmul.mubr.f32.gmra.mrb[0].mxu0 %v1673
  %v1862 = vpop.f32.mrb[0].mxu0
  %v1863 = vadd.f32 %v1709, %v1862
  %v1864 = vpop.f32.mrb[0].mxu0
  %1865 = vmatprep.mubr.f32.mxu0 0.0
  %1866 = vmatmul.mubr.f32.gmra.mrb[0].mxu0 %v1674
  %v1867 = vpop.f32.mrb[0].mxu0
  %v1868 = vadd.f32 %v1709, %v1867
  %v1869 = vpop.f32.mrb[0].mxu0
  %1870 = vmatprep.mubr.f32.mxu0 0.0
  %1871 = vmatmul.mubr.f32.gmra.mrb[0].mxu0 %v1675
  %v1872 = vpop.f32.mrb[0].mxu0
  %v1873 = vadd.f32 %v1709, %v1872
  %v1874 = vpop.f32.mrb[0].mxu0
  %1875 = vmatprep.mubr.f32.mxu0 0.0
  %1876 = vmatmul.mubr.f32.gmra.mrb[0].mxu0 %v1676
  %v1877 = vpop.f32.mrb[0].mxu0
  %v1878 = vadd.f32 %v1709, %v1877
  %v1879 = vpop.f32.mrb[0].mxu0
  %1880 = vmatprep.mubr.f32.mxu0 0.0
  %1881 = vmatmul.mubr.f32.gmra.mrb[0].mxu0 %v1677
  %v1882 = vpop.f32.mrb[0].mxu0
  %v1883 = vadd.f32 %v1709, %v1882
  %v1884 = vpop.f32.mrb[0].mxu0
  %1885 = vmatprep.mubr.f32.mxu0 0.0
  %1886 = vmatmul.mubr.f32.gmra.mrb[0].mxu0 %v1678
  %v1887 = vpop.f32.mrb[0].mxu0
  %v1888 = vadd.f32 %v1709, %v1887
  %v1889 = vpop.f32.mrb[0].mxu0
  %1890 = vmatprep.mubr.f32.mxu0 0.0
  %1891 = vmatmul.mubr.f32.gmra.mrb[0].mxu0 %v1679
  %v1892 = vpop.f32.mrb[0].mxu0
  %v1893 = vadd.f32 %v1709, %v1892
  %v1894 = vpop.f32.mrb[0].mxu0
  %1895 = vmatprep.mubr.f32.mxu0 0.0
  %1896 = vmatmul.mubr.f32.gmra.mrb[0].mxu0 %v1680
  %v1897 = vpop.f32.mrb[0].mxu0
  %v1898 = vadd.f32 %v1709, %v1897
  %v1899 = vpop.f32.mrb[0].mxu0
  %1900 = vmatprep.mubr.f32.mxu0 0.0
  %1901 = vmatmul.mubr.f32.gmra.mrb[0].mxu0 %v1681
  %v1902 = vpop.f32.mrb[0].mxu0
  %v1903 = vadd.f32 %v1709, %v1902
  %v1904 = vpop.f32.mrb[0].mxu0
  %1905 = vmatprep.mubr.f32.mxu0 0.0
  %1906 = vmatmul.mubr.f32.gmra.mrb[0].mxu0 %v1682
  %v1907 = vpop.f32.mrb[0].mxu0
  %v1908 = vadd.f32 %v1709, %v1907
  %v1909 = vpop.f32.mrb[0].mxu0
  %1910 = vmatprep.mubr.f32.mxu0 0.0
  %1911 = vmatmul.mubr.f32.gmra.mrb[0].mxu0 %v1683
  %v1912 = vpop.f32.mrb[0].mxu0
  %v1913 = vadd.f32 %v1709, %v1912
  %v1914 = vpop.f32.mrb[0].mxu0
  %1915 = vmatprep.mubr.f32.mxu0 0.0
  %1916 = vmatmul.mubr.f32.gmra.mrb[0].mxu0 %v1684
  %v1917 = vpop.f32.mrb[0].mxu0
  %v1918 = vadd.f32 %v1709, %v1917
  %v1919 = vpop.f32.mrb[0].mxu0
  %1920 = vmatprep.mubr.f32.mxu0 0.0
  %1921 = vmatmul.mubr.f32.gmra.mrb[0].mxu0 %v1685
  %v1922 = vpop.f32.mrb[0].mxu0
  %v1923 = vadd.f32 %v1709, %v1922
  %v1924 = vpop.f32.mrb[0].mxu0
  %1925 = vmatprep.mubr.f32.mxu0 0.0
  %1926 = vmatmul.mubr.f32.gmra.mrb[0].mxu0 %v1686
  %v1927 = vpop.f32.mrb[0].mxu0
  %v1928 = vadd.f32 %v1709, %v1927
  %v1929 = vpop.f32.mrb[0].mxu0
  %1930 = vmatprep.mubr.f32.mxu0 0.0
  %1931 = vmatmul.mubr.f32.gmra.mrb[0].mxu0 %v1687
  %v1932 = vpop.f32.mrb[0].mxu0
  %v1933 = vadd.f32 %v1709, %v1932
  %v1934 = vpop.f32.mrb[0].mxu0
  %1935 = vdwg.mxu0
  %v1936 = vmax.f32 %v1778, 0.0
  %v1937 = vmax.f32 %v1783, 0.0
  %v1938 = vmax.f32 %v1788, 0.0
  %v1939 = vmax.f32 %v1793, 0.0
  %v1940 = vmax.f32 %v1798, 0.0
  %v1941 = vmax.f32 %v1803, 0.0
  %v1942 = vmax.f32 %v1808, 0.0
  %v1943 = vmax.f32 %v1813, 0.0
  %v1944 = vmax.f32 %v1818, 0.0
  %v1945 = vmax.f32 %v1823, 0.0
  %v1946 = vmax.f32 %v1828, 0.0
  %v1947 = vmax.f32 %v1833, 0.0
  %v1948 = vmax.f32 %v1838, 0.0
  %v1949 = vmax.f32 %v1843, 0.0
  %v1950 = vmax.f32 %v1848, 0.0
  %v1951 = vmax.f32 %v1853, 0.0
  %v1952 = vmax.f32 %v1858, 0.0
  %v1953 = vmax.f32 %v1863, 0.0
  %v1954 = vmax.f32 %v1868, 0.0
  %v1955 = vmax.f32 %v1873, 0.0
  %v1956 = vmax.f32 %v1878, 0.0
  %v1957 = vmax.f32 %v1883, 0.0
  %v1958 = vmax.f32 %v1888, 0.0
  %v1959 = vmax.f32 %v1893, 0.0
  %v1960 = vmax.f32 %v1898, 0.0
  %v1961 = vmax.f32 %v1903, 0.0
  %v1962 = vmax.f32 %v1908, 0.0
  %v1963 = vmax.f32 %v1913, 0.0
  %v1964 = vmax.f32 %v1918, 0.0
  %v1965 = vmax.f32 %v1923, 0.0
  %v1966 = vmax.f32 %v1928, 0.0
  %v1967 = vmax.f32 %v1933, 0.0
  %1968 = vst.msk [vmem:[%s7 + $0x100] sm:$0xff] %vm981, %v1936
  %1969 = vst.msk [vmem:[%s7 + $0x108] sm:$0xff] %vm981, %v1937
  %1970 = vst.msk [vmem:[%s7 + $0x110] sm:$0xff] %vm981, %v1938
  %1971 = vst.msk [vmem:[%s7 + $0x118] sm:$0xff] %vm981, %v1939
  %1972 = vst.msk [vmem:[%s7 + $0x120] sm:$0xff] %vm981, %v1940
  %1973 = vst.msk [vmem:[%s7 + $0x128] sm:$0xff] %vm981, %v1941
  %1974 = vst.msk [vmem:[%s7 + $0x130] sm:$0xff] %vm981, %v1942
  %1975 = vst.msk [vmem:[%s7 + $0x138] sm:$0xff] %vm981, %v1943
  %1976 = vst.msk [vmem:[%s7 + $0x140] sm:$0xff] %vm981, %v1944
  %1977 = vst.msk [vmem:[%s7 + $0x148] sm:$0xff] %vm981, %v1945
  %1978 = vst.msk [vmem:[%s7 + $0x150] sm:$0xff] %vm981, %v1946
  %1979 = vst.msk [vmem:[%s7 + $0x158] sm:$0xff] %vm981, %v1947
  %1980 = vst.msk [vmem:[%s7 + $0x160] sm:$0xff] %vm981, %v1948
  %1981 = vst.msk [vmem:[%s7 + $0x168] sm:$0xff] %vm981, %v1949
  %1982 = vst.msk [vmem:[%s7 + $0x170] sm:$0xff] %vm981, %v1950
  %1983 = vst.msk [vmem:[%s7 + $0x178] sm:$0xff] %vm981, %v1951
  %1984 = vst.msk [vmem:[%s7 + $0x180] sm:$0xff] %vm981, %v1952
  %1985 = vst.msk [vmem:[%s7 + $0x188] sm:$0xff] %vm981, %v1953
  %1986 = vst.msk [vmem:[%s7 + $0x190] sm:$0xff] %vm981, %v1954
  %1987 = vst.msk [vmem:[%s7 + $0x198] sm:$0xff] %vm981, %v1955
  %1988 = vst.msk [vmem:[%s7 + $0x1a0] sm:$0xff] %vm981, %v1956
  %1989 = vst.msk [vmem:[%s7 + $0x1a8] sm:$0xff] %vm981, %v1957
  %1990 = vst.msk [vmem:[%s7 + $0x1b0] sm:$0xff] %vm981, %v1958
  %1991 = vst.msk [vmem:[%s7 + $0x1b8] sm:$0xff] %vm981, %v1959
  %1992 = vst.msk [vmem:[%s7 + $0x1c0] sm:$0xff] %vm981, %v1960
  %1993 = vst.msk [vmem:[%s7 + $0x1c8] sm:$0xff] %vm981, %v1961
  %1994 = vst.msk [vmem:[%s7 + $0x1d0] sm:$0xff] %vm981, %v1962
  %1995 = vst.msk [vmem:[%s7 + $0x1d8] sm:$0xff] %vm981, %v1963
  %1996 = vst.msk [vmem:[%s7 + $0x1e0] sm:$0xff] %vm981, %v1964
  %1997 = vst.msk [vmem:[%s7 + $0x1e8] sm:$0xff] %vm981, %v1965
  %1998 = vst.msk [vmem:[%s7 + $0x1f0] sm:$0xff] %vm981, %v1966
  %1999 = vst.msk [vmem:[%s7 + $0x1f8] sm:$0xff] %vm981, %v1967
  // Predicated region
  $region30: #{neural_network_forward.1} parent=0 // pred_check
    _
  $region31: #{neural_network_forward.1} parent=0 // pred_check_branch
    %2001 = sbr.rel (0) target = $region33
  $region32: #{neural_network_forward.1} parent=0 // pred_region
    _
  $region33: #{neural_network_forward.1} parent=0 // pred_fallthru
    _
  // Predicated region
  $region34: #{neural_network_forward.1} parent=0 // pred_check
    _
  $region35: #{neural_network_forward.1} parent=0 // pred_check_branch
    %2003 = sbr.rel (0) target = $region37
  $region36: #{neural_network_forward.1} parent=0 // pred_region
    _
  $region37: #{neural_network_forward.1} parent=0 // pred_fallthru
    _

</llo_original>
